<compile_context>
chip_gen: v6e
topology: v6e:2x2x1
jax: 0.10.0
libtpu: 0.0.40
codegen_flags: <defaults>
</compile_context>

<pallas_src>
import numpy as np
import jax
import jax.numpy as jnp
from jax.experimental import pallas as pl
from jax.experimental.pallas import tpu as pltpu


def _round_up(x: int, m: int) -> int:
    return (x + m - 1) // m * m


# ----------------------------------------------------------------------------
# Glue: build the separable interpolation / blur matrices (deterministic).
# ----------------------------------------------------------------------------
def bilinear_matrix(in_size: int, out_size: int, scale: float) -> np.ndarray:
    """Row-interpolation matrix matching PyTorch bilinear, align_corners=False."""
    m = np.zeros((out_size, in_size), dtype=np.float32)
    inv_scale = 1.0 / scale
    for od in range(out_size):
        src = (od + 0.5) * inv_scale - 0.5
        if src < 0.0:
            src = 0.0  # PyTorch area_pixel_compute_source_index clamp
        i0 = min(int(np.floor(src)), in_size - 1)
        i1 = min(i0 + 1, in_size - 1)
        lam = src - i0
        m[od, i0] += (1.0 - lam)
        m[od, i1] += lam
    return m


def gaussian_matrix(size: int, ksize: int, sigma: float) -> np.ndarray:
    """1-D Gaussian 'same' convolution (zero padding) expressed as a matrix."""
    half = ksize // 2
    xs = np.arange(ksize, dtype=np.float64) - half
    g = np.exp(-(xs ** 2) / (2.0 * sigma ** 2))
    g = (g / g.sum()).astype(np.float32)
    m = np.zeros((size, size), dtype=np.float32)
    for o in range(size):
        for k in range(ksize):
            i = o + k - half
            if 0 <= i < size:
                m[o, i] += g[k]
    return m


# ----------------------------------------------------------------------------
# Fused Pallas kernel: appearance (bilinear resize of frame 0) + motion band-pass.
# ----------------------------------------------------------------------------
def _fused_kernel(wh_ref, wwT_ref, gh_ref, gwT_ref, f0_ref, f2_ref,
                  oc_ref, of_ref, tc_scr, tf_scr):
    # wh_ref  : (ho, h)   bilinear row matrix              (whole-array VMEM, 1 buffer)
    # wwT_ref : (w, wo)   bilinear col matrix (transposed)
    # gh_ref  : (h, h)    0.5 * Gaussian row matrix (temporal-diff factor folded in)
    # gwT_ref : (w, w)    Gaussian col matrix (transposed)
    # f0_ref / f2_ref : (tt, 3, h, w)  frame-0 / frame-2 RGB planes of tt segments
    # oc_ref  : (3, tt, ho, wo)  appearance output (channel-major)
    # of_ref  : (3, tt, h,  w )  motion output (channel-major)
    # tc_scr  : (3*tt*ho_p, w)  H-pass appearance intermediate (lane-dense at w)
    # tf_scr  : (3*tt*h_p,  w)  H-pass motion intermediate
    tt, c, h, w = f0_ref.shape
    ho = oc_ref.shape[2]
    ho_p = tc_scr.shape[0] // (c * tt)      # sublane(8)-aligned slab heights
    h_p = tf_scr.shape[0] // (c * tt)

    wh = wh_ref[...]
    gh = gh_ref[...]

    # Pad rows exist only at toy (non 8-aligned) shapes; compile-time no-op otherwise.
    if ho_p != ho:
        tc_scr[...] = jnp.zeros_like(tc_scr)
    if h_p != h:
        tf_scr[...] = jnp.zeros_like(tf_scr)

    # ---- H-direction pass, per (channel, segment) plane ----------------------
    # Intermediates stay lane-dense at w; each result is stored straight into a
    # channel-major scratch slab so its live range ends immediately.  tt is capped
    # (<=4) by the tiling picker, so this static unroll stays small.
    for ci in range(c):
        for s in range(tt):
            f0 = f0_ref[s, ci]                       # (h, w)
            d = f2_ref[s, ci] - f0                   # temporal high-pass (0.5 in gh)
            tc_scr[pl.ds((ci * tt + s) * ho_p, ho), :] = jnp.dot(
                wh, f0, preferred_element_type=jnp.float32)
            tf_scr[pl.ds((ci * tt + s) * h_p, h), :] = jnp.dot(
                gh, d, preferred_element_type=jnp.float32)

    # ---- W-direction pass: ONE folded lane-dense matmul per path per step ----
    res_c = jnp.dot(tc_scr[...], wwT_ref[...], preferred_element_type=jnp.float32)
    res_f = jnp.dot(tf_scr[...], gwT_ref[...], preferred_element_type=jnp.float32)

    # Stores land directly in the (n, 3, t, ...) channel-major output layout.
    for ci in range(c):
        for s in range(tt):
            rc = (ci * tt + s) * ho_p
            rf = (ci * tt + s) * h_p
            oc_ref[ci, s] = res_c[rc:rc + ho, :]
            of_ref[ci, s] = res_f[rf:rf + h, :]


def _pick_tiling(t: int, h: int, w: int, ho: int, wo: int):
    """Segments per grid step + VMEM limit, tuned to this chip generation."""
    try:
        vmem_cap = int(pltpu.get_tpu_info().vmem_capacity_bytes)
    except Exception:
        vmem_cap = 64 * 1024 * 1024          # conservative default (v7x per-core VMEM)

    ho_p = _round_up(ho, 8)
    h_p = _round_up(h, 8)
    # Per-segment VMEM footprint: pipelined blocks are double-buffered, scratch is not.
    blocks_per_seg = 4 * 3 * (3 * h * w + ho * wo)        # f0 + f2 + x_f blocks, x_c block
    scratch_per_seg = 4 * 3 * (ho_p * w + h_p * w)        # H-pass slabs
    per_seg = 2 * blocks_per_seg + scratch_per_seg
    mats = 4 * (ho * h + w * wo + h * h + w * w)          # single-buffered VMEM operands
    headroom = 8 * 1024 * 1024                            # Mosaic internal scratch etc.

    budget = max(per_seg, int(vmem_cap * 0.6) - mats - headroom)
    tt = max(1, min(t,
                    budget // per_seg,    # fit this generation's VMEM
                    4,                    # bound the static unroll
                    max(1, t // 4)))      # keep >=4 steps along t: DMA overlap / 2-TC balance
    while t % tt:
        tt -= 1

    vmem_limit = min(int(vmem_cap * 0.9),
                     max(32 * 1024 * 1024, tt * per_seg + mats + headroom))
    return tt, int(vmem_limit)


# ----------------------------------------------------------------------------
# Net.forward equivalent (blocks = empty ModuleList -> returns the tuple)
# ----------------------------------------------------------------------------
def net_forward(x, num_segments):
    t = num_segments
    nt, dc, h, w = x.shape
    assert dc == 9 and nt % t == 0
    n = nt // t
    x6 = x.reshape(n, t, 3, 3, h, w)   # metadata-only view: (n, t, frame, rgb, h, w)

    scale = 160.0 / 256.0
    ho, wo = int(np.floor(h * scale)), int(np.floor(w * scale))

    # Separable operator matrices (whole-array VMEM residents: single buffer, no
    # per-step re-DMA, no double-buffering -- saves VMEM, esp. on v7x's 64 MiB).
    wh = jnp.asarray(bilinear_matrix(h, ho, scale), dtype=jnp.float32)          # (ho, h)
    wwT = jnp.asarray(bilinear_matrix(w, wo, scale).T, dtype=jnp.float32)       # (w, wo)
    # TODO(synk): MotionBandPassFilter's class definition is not in the source module;
    # reconstructed from its ctor args as 0.5*(frame2-frame0) followed by a 9x9
    # Gaussian (sigma=1.1, zero padding).  Validate against the PyTorch filter.
    gh = jnp.asarray(0.5 * gaussian_matrix(h, 9, 1.1), dtype=jnp.float32)       # (h, h)
    gwT = jnp.asarray(gaussian_matrix(w, 9, 1.1).T, dtype=jnp.float32)          # (w, w)

    tt, vmem_limit = _pick_tiling(t, h, w, ho, wo)
    ho_p, h_p = _round_up(ho, 8), _round_up(h, 8)
    grid = (n, t // tt)

    x_c, x_f = pl.pallas_call(
        _fused_kernel,
        out_shape=(
            jax.ShapeDtypeStruct((n, 3, t, ho, wo), jnp.float32),
            jax.ShapeDtypeStruct((n, 3, t, h, w), jnp.float32),
        ),
        grid=grid,
        in_specs=[
            pl.BlockSpec(memory_space=pltpu.MemorySpace.VMEM),   # wh   (resident)
            pl.BlockSpec(memory_space=pltpu.MemorySpace.VMEM),   # wwT  (resident)
            pl.BlockSpec(memory_space=pltpu.MemorySpace.VMEM),   # gh   (resident)
            pl.BlockSpec(memory_space=pltpu.MemorySpace.VMEM),   # gwT  (resident)
            # frame-0 block (read once, feeds BOTH paths); frame selected in index_map
            pl.BlockSpec((None, tt, None, 3, h, w), lambda i, j: (i, j, 0, 0, 0, 0)),
            # frame-2 block
            pl.BlockSpec((None, tt, None, 3, h, w), lambda i, j: (i, j, 2, 0, 0, 0)),
        ],
        out_specs=(
            # write (n, 3, t, ho, wo) channel-major layout directly -> no XLA transpose
            pl.BlockSpec((None, 3, tt, ho, wo), lambda i, j: (i, 0, j, 0, 0)),
            pl.BlockSpec((None, 3, tt, h, w), lambda i, j: (i, 0, j, 0, 0)),
        ),
        scratch_shapes=[
            pltpu.VMEM((3 * tt * ho_p, w), jnp.float32),   # H-pass appearance slabs
            pltpu.VMEM((3 * tt * h_p, w), jnp.float32),    # H-pass motion slabs
        ],
        compiler_params=pltpu.CompilerParams(
            dimension_semantics=("parallel", "parallel"),
            vmem_limit_bytes=vmem_limit,
        ),
    )(wh, wwT, gh, gwT, x6, x6)

    # blocks == nn.ModuleList([]) -> block loop is a no-op (block builders such as
    # create_resnet were not part of the provided module source).
    return (x_c, x_f)


if __name__ == "__main__":
    num_segments = 8
    n, h, w = 2, 16, 16
    key = jax.random.PRNGKey(0)
    x = jax.random.normal(key, (n * num_segments, 9, h, w), dtype=jnp.float32)

    fwd = jax.jit(net_forward, static_argnums=(1,))
    x_c, x_f = fwd(x, num_segments)
    jax.block_until_ready(x_c)
    jax.block_until_ready(x_f)

    assert x_c.shape == (n, 3, num_segments, 10, 10), x_c.shape
    assert x_f.shape == (n, 3, num_segments, h, w), x_f.shape

    # Numerical sanity check against a pure-JAX reference using the same matrices.
    scale = 160.0 / 256.0
    ho, wo = int(np.floor(h * scale)), int(np.floor(w * scale))
    x6 = x.reshape(n, num_segments, 3, 3, h, w)
    wh_r = jnp.asarray(bilinear_matrix(h, ho, scale))
    ww_r = jnp.asarray(bilinear_matrix(w, wo, scale))
    gh_r = jnp.asarray(gaussian_matrix(h, 9, 1.1))
    gw_r = jnp.asarray(gaussian_matrix(w, 9, 1.1))
    hp = jax.lax.Precision.HIGHEST
    f0 = x6[:, :, 0]
    f2 = x6[:, :, 2]
    ref_c = jnp.einsum("oh,ntchw,pw->nctop", wh_r, f0, ww_r, precision=hp)
    ref_f = jnp.einsum("oh,ntchw,pw->nctop", gh_r, 0.5 * (f2 - f0), gw_r, precision=hp)
    np.testing.assert_allclose(np.asarray(x_c), np.asarray(ref_c), rtol=2e-3, atol=2e-3)
    np.testing.assert_allclose(np.asarray(x_f), np.asarray(ref_f), rtol=2e-3, atol=2e-3)

    print("KERNEL_OK")
</pallas_src>

<mosaic_0001>
module attributes {stable_mosaic.version = 11 : i64} {
  func.func @_fused_kernel(%arg0: i32, %arg1: i32, %arg2: memref<10x16xf32, #tpu.memory_space<vmem>>, %arg3: memref<16x10xf32, #tpu.memory_space<vmem>>, %arg4: memref<16x16xf32, #tpu.memory_space<vmem>>, %arg5: memref<16x16xf32, #tpu.memory_space<vmem>>, %arg6: memref<1x2x1x3x16x16xf32, #tpu.memory_space<vmem>>, %arg7: memref<1x2x1x3x16x16xf32, #tpu.memory_space<vmem>>, %arg8: memref<1x3x2x10x10xf32, #tpu.memory_space<vmem>>, %arg9: memref<1x3x2x16x16xf32, #tpu.memory_space<vmem>>, %arg10: memref<96x16xf32, #tpu.memory_space<vmem>>, %arg11: memref<96x16xf32, #tpu.memory_space<vmem>>) attributes {dimension_semantics = [#tpu.dimension_semantics<parallel>, #tpu.dimension_semantics<parallel>], iteration_bounds = array<i64: 2, 4>, scalar_prefetch = 0 : i64, scratch_operands = 2 : i64, tpu.core_type = #tpu.core_type<tc>, window_params = [{pipeline_mode = #tpu.pipeline_mode<synchronous>, transform_indices = @transform_0, window_bounds = array<i64: 10, 16>}, {pipeline_mode = #tpu.pipeline_mode<synchronous>, transform_indices = @transform_1, window_bounds = array<i64: 16, 10>}, {pipeline_mode = #tpu.pipeline_mode<synchronous>, transform_indices = @transform_2, window_bounds = array<i64: 16, 16>}, {pipeline_mode = #tpu.pipeline_mode<synchronous>, transform_indices = @transform_3, window_bounds = array<i64: 16, 16>}, {transform_indices = @transform_4, window_bounds = array<i64: 1, 2, 1, 3, 16, 16>}, {transform_indices = @transform_5, window_bounds = array<i64: 1, 2, 1, 3, 16, 16>}, {transform_indices = @transform_6, window_bounds = array<i64: 1, 3, 2, 10, 10>}, {transform_indices = @transform_7, window_bounds = array<i64: 1, 3, 2, 16, 16>}]} {
    %c0 = arith.constant 0 : index
    %c0_0 = arith.constant 0 : index
    %0 = vector.load %arg2[%c0, %c0_0] : memref<10x16xf32, #tpu.memory_space<vmem>>, vector<10x16xf32>
    %c0_1 = arith.constant 0 : index
    %c0_2 = arith.constant 0 : index
    %1 = vector.load %arg4[%c0_1, %c0_2] : memref<16x16xf32, #tpu.memory_space<vmem>>, vector<16x16xf32>
    %cst = arith.constant 0.000000e+00 : f32
    %2 = vector.broadcast %cst : f32 to vector<96x16xf32>
    %c0_3 = arith.constant 0 : index
    %c0_4 = arith.constant 0 : index
    %3 = vector.load %arg10[%c0_3, %c0_4] : memref<96x16xf32, #tpu.memory_space<vmem>>, vector<96x16xf32>
    tpu.vector_store %arg10[%c0_3, %c0_4], %2 {strides = array<i32>} : memref<96x16xf32, #tpu.memory_space<vmem>>, vector<96x16xf32>,
    %c0_5 = arith.constant 0 : index
    %c0_6 = arith.constant 0 : index
    %c0_7 = arith.constant 0 : index
    %c0_8 = arith.constant 0 : index
    %c0_9 = arith.constant 0 : index
    %c0_10 = arith.constant 0 : index
    %4 = vector.load %arg6[%c0_5, %c0_6, %c0_7, %c0_8, %c0_9, %c0_10] : memref<1x2x1x3x16x16xf32, #tpu.memory_space<vmem>>, vector<1x1x1x1x16x16xf32>
    %5 = vector.shape_cast %4 : vector<1x1x1x1x16x16xf32> to vector<16x16xf32>
    %c0_11 = arith.constant 0 : index
    %c0_12 = arith.constant 0 : index
    %c0_13 = arith.constant 0 : index
    %c0_14 = arith.constant 0 : index
    %c0_15 = arith.constant 0 : index
    %c0_16 = arith.constant 0 : index
    %6 = vector.load %arg7[%c0_11, %c0_12, %c0_13, %c0_14, %c0_15, %c0_16] : memref<1x2x1x3x16x16xf32, #tpu.memory_space<vmem>>, vector<1x1x1x1x16x16xf32>
    %7 = vector.shape_cast %6 : vector<1x1x1x1x16x16xf32> to vector<16x16xf32>
    %8 = arith.subf %7, %5 : vector<16x16xf32>
    %cst_17 = arith.constant dense<0.000000e+00> : vector<10x16xf32>
    %9 = tpu.matmul %0, %5, %cst_17 {dimension_numbers = #tpu.dot_dimension_numbers<[1], [0], [0], [1], [0, 0, 1, 1], [], []>} : vector<10x16xf32>, vector<16x16xf32>, vector<10x16xf32> -> vector<10x16xf32>
    %c0_18 = arith.constant 0 : index
    %c0_19 = arith.constant 0 : index
    %10 = vector.load %arg10[%c0_18, %c0_19] : memref<96x16xf32, #tpu.memory_space<vmem>>, vector<10x16xf32>
    tpu.vector_store %arg10[%c0_18, %c0_19], %9 {strides = array<i32>} : memref<96x16xf32, #tpu.memory_space<vmem>>, vector<10x16xf32>,
    %cst_20 = arith.constant dense<0.000000e+00> : vector<16x16xf32>
    %11 = tpu.matmul %1, %8, %cst_20 {dimension_numbers = #tpu.dot_dimension_numbers<[1], [0], [0], [1], [0, 0, 1, 1], [], []>} : vector<16x16xf32>, vector<16x16xf32>, vector<16x16xf32> -> vector<16x16xf32>
    %c0_21 = arith.constant 0 : index
    %c0_22 = arith.constant 0 : index
    %12 = vector.load %arg11[%c0_21, %c0_22] : memref<96x16xf32, #tpu.memory_space<vmem>>, vector<16x16xf32>
    tpu.vector_store %arg11[%c0_21, %c0_22], %11 {strides = array<i32>} : memref<96x16xf32, #tpu.memory_space<vmem>>, vector<16x16xf32>,
    %c0_23 = arith.constant 0 : index
    %c1 = arith.constant 1 : index
    %c0_24 = arith.constant 0 : index
    %c0_25 = arith.constant 0 : index
    %c0_26 = arith.constant 0 : index
    %c0_27 = arith.constant 0 : index
    %13 = vector.load %arg6[%c0_23, %c1, %c0_24, %c0_25, %c0_26, %c0_27] : memref<1x2x1x3x16x16xf32, #tpu.memory_space<vmem>>, vector<1x1x1x1x16x16xf32>
    %14 = vector.shape_cast %13 : vector<1x1x1x1x16x16xf32> to vector<16x16xf32>
    %c0_28 = arith.constant 0 : index
    %c1_29 = arith.constant 1 : index
    %c0_30 = arith.constant 0 : index
    %c0_31 = arith.constant 0 : index
    %c0_32 = arith.constant 0 : index
    %c0_33 = arith.constant 0 : index
    %15 = vector.load %arg7[%c0_28, %c1_29, %c0_30, %c0_31, %c0_32, %c0_33] : memref<1x2x1x3x16x16xf32, #tpu.memory_space<vmem>>, vector<1x1x1x1x16x16xf32>
    %16 = vector.shape_cast %15 : vector<1x1x1x1x16x16xf32> to vector<16x16xf32>
    %17 = arith.subf %16, %14 : vector<16x16xf32>
    %cst_34 = arith.constant dense<0.000000e+00> : vector<10x16xf32>
    %18 = tpu.matmul %0, %14, %cst_34 {dimension_numbers = #tpu.dot_dimension_numbers<[1], [0], [0], [1], [0, 0, 1, 1], [], []>} : vector<10x16xf32>, vector<16x16xf32>, vector<10x16xf32> -> vector<10x16xf32>
    %c16 = arith.constant 16 : index
    %c0_35 = arith.constant 0 : index
    %19 = vector.load %arg10[%c16, %c0_35] : memref<96x16xf32, #tpu.memory_space<vmem>>, vector<10x16xf32>
    tpu.vector_store %arg10[%c16, %c0_35], %18 {strides = array<i32>} : memref<96x16xf32, #tpu.memory_space<vmem>>, vector<10x16xf32>,
    %cst_36 = arith.constant dense<0.000000e+00> : vector<16x16xf32>
    %20 = tpu.matmul %1, %17, %cst_36 {dimension_numbers = #tpu.dot_dimension_numbers<[1], [0], [0], [1], [0, 0, 1, 1], [], []>} : vector<16x16xf32>, vector<16x16xf32>, vector<16x16xf32> -> vector<16x16xf32>
    %c16_37 = arith.constant 16 : index
    %c0_38 = arith.constant 0 : index
    %21 = vector.load %arg11[%c16_37, %c0_38] : memref<96x16xf32, #tpu.memory_space<vmem>>, vector<16x16xf32>
    tpu.vector_store %arg11[%c16_37, %c0_38], %20 {strides = array<i32>} : memref<96x16xf32, #tpu.memory_space<vmem>>, vector<16x16xf32>,
    %c0_39 = arith.constant 0 : index
    %c0_40 = arith.constant 0 : index
    %c0_41 = arith.constant 0 : index
    %c1_42 = arith.constant 1 : index
    %c0_43 = arith.constant 0 : index
    %c0_44 = arith.constant 0 : index
    %22 = vector.load %arg6[%c0_39, %c0_40, %c0_41, %c1_42, %c0_43, %c0_44] : memref<1x2x1x3x16x16xf32, #tpu.memory_space<vmem>>, vector<1x1x1x1x16x16xf32>
    %23 = vector.shape_cast %22 : vector<1x1x1x1x16x16xf32> to vector<16x16xf32>
    %c0_45 = arith.constant 0 : index
    %c0_46 = arith.constant 0 : index
    %c0_47 = arith.constant 0 : index
    %c1_48 = arith.constant 1 : index
    %c0_49 = arith.constant 0 : index
    %c0_50 = arith.constant 0 : index
    %24 = vector.load %arg7[%c0_45, %c0_46, %c0_47, %c1_48, %c0_49, %c0_50] : memref<1x2x1x3x16x16xf32, #tpu.memory_space<vmem>>, vector<1x1x1x1x16x16xf32>
    %25 = vector.shape_cast %24 : vector<1x1x1x1x16x16xf32> to vector<16x16xf32>
    %26 = arith.subf %25, %23 : vector<16x16xf32>
    %cst_51 = arith.constant dense<0.000000e+00> : vector<10x16xf32>
    %27 = tpu.matmul %0, %23, %cst_51 {dimension_numbers = #tpu.dot_dimension_numbers<[1], [0], [0], [1], [0, 0, 1, 1], [], []>} : vector<10x16xf32>, vector<16x16xf32>, vector<10x16xf32> -> vector<10x16xf32>
    %c32 = arith.constant 32 : index
    %c0_52 = arith.constant 0 : index
    %28 = vector.load %arg10[%c32, %c0_52] : memref<96x16xf32, #tpu.memory_space<vmem>>, vector<10x16xf32>
    tpu.vector_store %arg10[%c32, %c0_52], %27 {strides = array<i32>} : memref<96x16xf32, #tpu.memory_space<vmem>>, vector<10x16xf32>,
    %cst_53 = arith.constant dense<0.000000e+00> : vector<16x16xf32>
    %29 = tpu.matmul %1, %26, %cst_53 {dimension_numbers = #tpu.dot_dimension_numbers<[1], [0], [0], [1], [0, 0, 1, 1], [], []>} : vector<16x16xf32>, vector<16x16xf32>, vector<16x16xf32> -> vector<16x16xf32>
    %c32_54 = arith.constant 32 : index
    %c0_55 = arith.constant 0 : index
    %30 = vector.load %arg11[%c32_54, %c0_55] : memref<96x16xf32, #tpu.memory_space<vmem>>, vector<16x16xf32>
    tpu.vector_store %arg11[%c32_54, %c0_55], %29 {strides = array<i32>} : memref<96x16xf32, #tpu.memory_space<vmem>>, vector<16x16xf32>,
    %c0_56 = arith.constant 0 : index
    %c1_57 = arith.constant 1 : index
    %c0_58 = arith.constant 0 : index
    %c1_59 = arith.constant 1 : index
    %c0_60 = arith.constant 0 : index
    %c0_61 = arith.constant 0 : index
    %31 = vector.load %arg6[%c0_56, %c1_57, %c0_58, %c1_59, %c0_60, %c0_61] : memref<1x2x1x3x16x16xf32, #tpu.memory_space<vmem>>, vector<1x1x1x1x16x16xf32>
    %32 = vector.shape_cast %31 : vector<1x1x1x1x16x16xf32> to vector<16x16xf32>
    %c0_62 = arith.constant 0 : index
    %c1_63 = arith.constant 1 : index
    %c0_64 = arith.constant 0 : index
    %c1_65 = arith.constant 1 : index
    %c0_66 = arith.constant 0 : index
    %c0_67 = arith.constant 0 : index
    %33 = vector.load %arg7[%c0_62, %c1_63, %c0_64, %c1_65, %c0_66, %c0_67] : memref<1x2x1x3x16x16xf32, #tpu.memory_space<vmem>>, vector<1x1x1x1x16x16xf32>
    %34 = vector.shape_cast %33 : vector<1x1x1x1x16x16xf32> to vector<16x16xf32>
    %35 = arith.subf %34, %32 : vector<16x16xf32>
    %cst_68 = arith.constant dense<0.000000e+00> : vector<10x16xf32>
    %36 = tpu.matmul %0, %32, %cst_68 {dimension_numbers = #tpu.dot_dimension_numbers<[1], [0], [0], [1], [0, 0, 1, 1], [], []>} : vector<10x16xf32>, vector<16x16xf32>, vector<10x16xf32> -> vector<10x16xf32>
    %c48 = arith.constant 48 : index
    %c0_69 = arith.constant 0 : index
    %37 = vector.load %arg10[%c48, %c0_69] : memref<96x16xf32, #tpu.memory_space<vmem>>, vector<10x16xf32>
    tpu.vector_store %arg10[%c48, %c0_69], %36 {strides = array<i32>} : memref<96x16xf32, #tpu.memory_space<vmem>>, vector<10x16xf32>,
    %cst_70 = arith.constant dense<0.000000e+00> : vector<16x16xf32>
    %38 = tpu.matmul %1, %35, %cst_70 {dimension_numbers = #tpu.dot_dimension_numbers<[1], [0], [0], [1], [0, 0, 1, 1], [], []>} : vector<16x16xf32>, vector<16x16xf32>, vector<16x16xf32> -> vector<16x16xf32>
    %c48_71 = arith.constant 48 : index
    %c0_72 = arith.constant 0 : index
    %39 = vector.load %arg11[%c48_71, %c0_72] : memref<96x16xf32, #tpu.memory_space<vmem>>, vector<16x16xf32>
    tpu.vector_store %arg11[%c48_71, %c0_72], %38 {strides = array<i32>} : memref<96x16xf32, #tpu.memory_space<vmem>>, vector<16x16xf32>,
    %c0_73 = arith.constant 0 : index
    %c0_74 = arith.constant 0 : index
    %c0_75 = arith.constant 0 : index
    %c2 = arith.constant 2 : index
    %c0_76 = arith.constant 0 : index
    %c0_77 = arith.constant 0 : index
    %40 = vector.load %arg6[%c0_73, %c0_74, %c0_75, %c2, %c0_76, %c0_77] : memref<1x2x1x3x16x16xf32, #tpu.memory_space<vmem>>, vector<1x1x1x1x16x16xf32>
    %41 = vector.shape_cast %40 : vector<1x1x1x1x16x16xf32> to vector<16x16xf32>
    %c0_78 = arith.constant 0 : index
    %c0_79 = arith.constant 0 : index
    %c0_80 = arith.constant 0 : index
    %c2_81 = arith.constant 2 : index
    %c0_82 = arith.constant 0 : index
    %c0_83 = arith.constant 0 : index
    %42 = vector.load %arg7[%c0_78, %c0_79, %c0_80, %c2_81, %c0_82, %c0_83] : memref<1x2x1x3x16x16xf32, #tpu.memory_space<vmem>>, vector<1x1x1x1x16x16xf32>
    %43 = vector.shape_cast %42 : vector<1x1x1x1x16x16xf32> to vector<16x16xf32>
    %44 = arith.subf %43, %41 : vector<16x16xf32>
    %cst_84 = arith.constant dense<0.000000e+00> : vector<10x16xf32>
    %45 = tpu.matmul %0, %41, %cst_84 {dimension_numbers = #tpu.dot_dimension_numbers<[1], [0], [0], [1], [0, 0, 1, 1], [], []>} : vector<10x16xf32>, vector<16x16xf32>, vector<10x16xf32> -> vector<10x16xf32>
    %c64 = arith.constant 64 : index
    %c0_85 = arith.constant 0 : index
    %46 = vector.load %arg10[%c64, %c0_85] : memref<96x16xf32, #tpu.memory_space<vmem>>, vector<10x16xf32>
    tpu.vector_store %arg10[%c64, %c0_85], %45 {strides = array<i32>} : memref<96x16xf32, #tpu.memory_space<vmem>>, vector<10x16xf32>,
    %cst_86 = arith.constant dense<0.000000e+00> : vector<16x16xf32>
    %47 = tpu.matmul %1, %44, %cst_86 {dimension_numbers = #tpu.dot_dimension_numbers<[1], [0], [0], [1], [0, 0, 1, 1], [], []>} : vector<16x16xf32>, vector<16x16xf32>, vector<16x16xf32> -> vector<16x16xf32>
    %c64_87 = arith.constant 64 : index
    %c0_88 = arith.constant 0 : index
    %48 = vector.load %arg11[%c64_87, %c0_88] : memref<96x16xf32, #tpu.memory_space<vmem>>, vector<16x16xf32>
    tpu.vector_store %arg11[%c64_87, %c0_88], %47 {strides = array<i32>} : memref<96x16xf32, #tpu.memory_space<vmem>>, vector<16x16xf32>,
    %c0_89 = arith.constant 0 : index
    %c1_90 = arith.constant 1 : index
    %c0_91 = arith.constant 0 : index
    %c2_92 = arith.constant 2 : index
    %c0_93 = arith.constant 0 : index
    %c0_94 = arith.constant 0 : index
    %49 = vector.load %arg6[%c0_89, %c1_90, %c0_91, %c2_92, %c0_93, %c0_94] : memref<1x2x1x3x16x16xf32, #tpu.memory_space<vmem>>, vector<1x1x1x1x16x16xf32>
    %50 = vector.shape_cast %49 : vector<1x1x1x1x16x16xf32> to vector<16x16xf32>
    %c0_95 = arith.constant 0 : index
    %c1_96 = arith.constant 1 : index
    %c0_97 = arith.constant 0 : index
    %c2_98 = arith.constant 2 : index
    %c0_99 = arith.constant 0 : index
    %c0_100 = arith.constant 0 : index
    %51 = vector.load %arg7[%c0_95, %c1_96, %c0_97, %c2_98, %c0_99, %c0_100] : memref<1x2x1x3x16x16xf32, #tpu.memory_space<vmem>>, vector<1x1x1x1x16x16xf32>
    %52 = vector.shape_cast %51 : vector<1x1x1x1x16x16xf32> to vector<16x16xf32>
    %53 = arith.subf %52, %50 : vector<16x16xf32>
    %cst_101 = arith.constant dense<0.000000e+00> : vector<10x16xf32>
    %54 = tpu.matmul %0, %50, %cst_101 {dimension_numbers = #tpu.dot_dimension_numbers<[1], [0], [0], [1], [0, 0, 1, 1], [], []>} : vector<10x16xf32>, vector<16x16xf32>, vector<10x16xf32> -> vector<10x16xf32>
    %c80 = arith.constant 80 : index
    %c0_102 = arith.constant 0 : index
    %55 = vector.load %arg10[%c80, %c0_102] : memref<96x16xf32, #tpu.memory_space<vmem>>, vector<10x16xf32>
    tpu.vector_store %arg10[%c80, %c0_102], %54 {strides = array<i32>} : memref<96x16xf32, #tpu.memory_space<vmem>>, vector<10x16xf32>,
    %cst_103 = arith.constant dense<0.000000e+00> : vector<16x16xf32>
    %56 = tpu.matmul %1, %53, %cst_103 {dimension_numbers = #tpu.dot_dimension_numbers<[1], [0], [0], [1], [0, 0, 1, 1], [], []>} : vector<16x16xf32>, vector<16x16xf32>, vector<16x16xf32> -> vector<16x16xf32>
    %c80_104 = arith.constant 80 : index
    %c0_105 = arith.constant 0 : index
    %57 = vector.load %arg11[%c80_104, %c0_105] : memref<96x16xf32, #tpu.memory_space<vmem>>, vector<16x16xf32>
    tpu.vector_store %arg11[%c80_104, %c0_105], %56 {strides = array<i32>} : memref<96x16xf32, #tpu.memory_space<vmem>>, vector<16x16xf32>,
    %c0_106 = arith.constant 0 : index
    %c0_107 = arith.constant 0 : index
    %58 = vector.load %arg10[%c0_106, %c0_107] : memref<96x16xf32, #tpu.memory_space<vmem>>, vector<96x16xf32>
    %c0_108 = arith.constant 0 : index
    %c0_109 = arith.constant 0 : index
    %59 = vector.load %arg3[%c0_108, %c0_109] : memref<16x10xf32, #tpu.memory_space<vmem>>, vector<16x10xf32>
    %cst_110 = arith.constant dense<0.000000e+00> : vector<96x10xf32>
    %60 = tpu.matmul %58, %59, %cst_110 {dimension_numbers = #tpu.dot_dimension_numbers<[1], [0], [0], [1], [0, 0, 1, 1], [], []>} : vector<96x16xf32>, vector<16x10xf32>, vector<96x10xf32> -> vector<96x10xf32>
    %c0_111 = arith.constant 0 : index
    %c0_112 = arith.constant 0 : index
    %61 = vector.load %arg11[%c0_111, %c0_112] : memref<96x16xf32, #tpu.memory_space<vmem>>, vector<96x16xf32>
    %c0_113 = arith.constant 0 : index
    %c0_114 = arith.constant 0 : index
    %62 = vector.load %arg5[%c0_113, %c0_114] : memref<16x16xf32, #tpu.memory_space<vmem>>, vector<16x16xf32>
    %cst_115 = arith.constant dense<0.000000e+00> : vector<96x16xf32>
    %63 = tpu.matmul %61, %62, %cst_115 {dimension_numbers = #tpu.dot_dimension_numbers<[1], [0], [0], [1], [0, 0, 1, 1], [], []>} : vector<96x16xf32>, vector<16x16xf32>, vector<96x16xf32> -> vector<96x16xf32>
    %64 = vector.extract_strided_slice %60 {offsets = [0, 0], sizes = [10, 10], strides = [1, 1]} : vector<96x10xf32> to vector<10x10xf32>
    %c0_116 = arith.constant 0 : index
    %c0_117 = arith.constant 0 : index
    %c0_118 = arith.constant 0 : index
    %c0_119 = arith.constant 0 : index
    %c0_120 = arith.constant 0 : index
    %65 = vector.load %arg8[%c0_116, %c0_117, %c0_118, %c0_119, %c0_120] : memref<1x3x2x10x10xf32, #tpu.memory_space<vmem>>, vector<1x1x1x10x10xf32>
    %66 = vector.shape_cast %65 : vector<1x1x1x10x10xf32> to vector<10x10xf32>
    %67 = vector.shape_cast %64 : vector<10x10xf32> to vector<1x1x1x10x10xf32>
    tpu.vector_store %arg8[%c0_116, %c0_117, %c0_118, %c0_119, %c0_120], %67 {strides = array<i32>} : memref<1x3x2x10x10xf32, #tpu.memory_space<vmem>>, vector<1x1x1x10x10xf32>,
    %68 = vector.extract_strided_slice %63 {offsets = [0, 0], sizes = [16, 16], strides = [1, 1]} : vector<96x16xf32> to vector<16x16xf32>
    %c0_121 = arith.constant 0 : index
    %c0_122 = arith.constant 0 : index
    %c0_123 = arith.constant 0 : index
    %c0_124 = arith.constant 0 : index
    %c0_125 = arith.constant 0 : index
    %69 = vector.load %arg9[%c0_121, %c0_122, %c0_123, %c0_124, %c0_125] : memref<1x3x2x16x16xf32, #tpu.memory_space<vmem>>, vector<1x1x1x16x16xf32>
    %70 = vector.shape_cast %69 : vector<1x1x1x16x16xf32> to vector<16x16xf32>
    %71 = vector.shape_cast %68 : vector<16x16xf32> to vector<1x1x1x16x16xf32>
    tpu.vector_store %arg9[%c0_121, %c0_122, %c0_123, %c0_124, %c0_125], %71 {strides = array<i32>} : memref<1x3x2x16x16xf32, #tpu.memory_space<vmem>>, vector<1x1x1x16x16xf32>,
    %72 = vector.extract_strided_slice %60 {offsets = [16, 0], sizes = [10, 10], strides = [1, 1]} : vector<96x10xf32> to vector<10x10xf32>
    %c0_126 = arith.constant 0 : index
    %c0_127 = arith.constant 0 : index
    %c1_128 = arith.constant 1 : index
    %c0_129 = arith.constant 0 : index
    %c0_130 = arith.constant 0 : index
    %73 = vector.load %arg8[%c0_126, %c0_127, %c1_128, %c0_129, %c0_130] : memref<1x3x2x10x10xf32, #tpu.memory_space<vmem>>, vector<1x1x1x10x10xf32>
    %74 = vector.shape_cast %73 : vector<1x1x1x10x10xf32> to vector<10x10xf32>
    %75 = vector.shape_cast %72 : vector<10x10xf32> to vector<1x1x1x10x10xf32>
    tpu.vector_store %arg8[%c0_126, %c0_127, %c1_128, %c0_129, %c0_130], %75 {strides = array<i32>} : memref<1x3x2x10x10xf32, #tpu.memory_space<vmem>>, vector<1x1x1x10x10xf32>,
    %76 = vector.extract_strided_slice %63 {offsets = [16, 0], sizes = [16, 16], strides = [1, 1]} : vector<96x16xf32> to vector<16x16xf32>
    %c0_131 = arith.constant 0 : index
    %c0_132 = arith.constant 0 : index
    %c1_133 = arith.constant 1 : index
    %c0_134 = arith.constant 0 : index
    %c0_135 = arith.constant 0 : index
    %77 = vector.load %arg9[%c0_131, %c0_132, %c1_133, %c0_134, %c0_135] : memref<1x3x2x16x16xf32, #tpu.memory_space<vmem>>, vector<1x1x1x16x16xf32>
    %78 = vector.shape_cast %77 : vector<1x1x1x16x16xf32> to vector<16x16xf32>
    %79 = vector.shape_cast %76 : vector<16x16xf32> to vector<1x1x1x16x16xf32>
    tpu.vector_store %arg9[%c0_131, %c0_132, %c1_133, %c0_134, %c0_135], %79 {strides = array<i32>} : memref<1x3x2x16x16xf32, #tpu.memory_space<vmem>>, vector<1x1x1x16x16xf32>,
    %80 = vector.extract_strided_slice %60 {offsets = [32, 0], sizes = [10, 10], strides = [1, 1]} : vector<96x10xf32> to vector<10x10xf32>
    %c0_136 = arith.constant 0 : index
    %c1_137 = arith.constant 1 : index
    %c0_138 = arith.constant 0 : index
    %c0_139 = arith.constant 0 : index
    %c0_140 = arith.constant 0 : index
    %81 = vector.load %arg8[%c0_136, %c1_137, %c0_138, %c0_139, %c0_140] : memref<1x3x2x10x10xf32, #tpu.memory_space<vmem>>, vector<1x1x1x10x10xf32>
    %82 = vector.shape_cast %81 : vector<1x1x1x10x10xf32> to vector<10x10xf32>
    %83 = vector.shape_cast %80 : vector<10x10xf32> to vector<1x1x1x10x10xf32>
    tpu.vector_store %arg8[%c0_136, %c1_137, %c0_138, %c0_139, %c0_140], %83 {strides = array<i32>} : memref<1x3x2x10x10xf32, #tpu.memory_space<vmem>>, vector<1x1x1x10x10xf32>,
    %84 = vector.extract_strided_slice %63 {offsets = [32, 0], sizes = [16, 16], strides = [1, 1]} : vector<96x16xf32> to vector<16x16xf32>
    %c0_141 = arith.constant 0 : index
    %c1_142 = arith.constant 1 : index
    %c0_143 = arith.constant 0 : index
    %c0_144 = arith.constant 0 : index
    %c0_145 = arith.constant 0 : index
    %85 = vector.load %arg9[%c0_141, %c1_142, %c0_143, %c0_144, %c0_145] : memref<1x3x2x16x16xf32, #tpu.memory_space<vmem>>, vector<1x1x1x16x16xf32>
    %86 = vector.shape_cast %85 : vector<1x1x1x16x16xf32> to vector<16x16xf32>
    %87 = vector.shape_cast %84 : vector<16x16xf32> to vector<1x1x1x16x16xf32>
    tpu.vector_store %arg9[%c0_141, %c1_142, %c0_143, %c0_144, %c0_145], %87 {strides = array<i32>} : memref<1x3x2x16x16xf32, #tpu.memory_space<vmem>>, vector<1x1x1x16x16xf32>,
    %88 = vector.extract_strided_slice %60 {offsets = [48, 0], sizes = [10, 10], strides = [1, 1]} : vector<96x10xf32> to vector<10x10xf32>
    %c0_146 = arith.constant 0 : index
    %c1_147 = arith.constant 1 : index
    %c1_148 = arith.constant 1 : index
    %c0_149 = arith.constant 0 : index
    %c0_150 = arith.constant 0 : index
    %89 = vector.load %arg8[%c0_146, %c1_147, %c1_148, %c0_149, %c0_150] : memref<1x3x2x10x10xf32, #tpu.memory_space<vmem>>, vector<1x1x1x10x10xf32>
    %90 = vector.shape_cast %89 : vector<1x1x1x10x10xf32> to vector<10x10xf32>
    %91 = vector.shape_cast %88 : vector<10x10xf32> to vector<1x1x1x10x10xf32>
    tpu.vector_store %arg8[%c0_146, %c1_147, %c1_148, %c0_149, %c0_150], %91 {strides = array<i32>} : memref<1x3x2x10x10xf32, #tpu.memory_space<vmem>>, vector<1x1x1x10x10xf32>,
    %92 = vector.extract_strided_slice %63 {offsets = [48, 0], sizes = [16, 16], strides = [1, 1]} : vector<96x16xf32> to vector<16x16xf32>
    %c0_151 = arith.constant 0 : index
    %c1_152 = arith.constant 1 : index
    %c1_153 = arith.constant 1 : index
    %c0_154 = arith.constant 0 : index
    %c0_155 = arith.constant 0 : index
    %93 = vector.load %arg9[%c0_151, %c1_152, %c1_153, %c0_154, %c0_155] : memref<1x3x2x16x16xf32, #tpu.memory_space<vmem>>, vector<1x1x1x16x16xf32>
    %94 = vector.shape_cast %93 : vector<1x1x1x16x16xf32> to vector<16x16xf32>
    %95 = vector.shape_cast %92 : vector<16x16xf32> to vector<1x1x1x16x16xf32>
    tpu.vector_store %arg9[%c0_151, %c1_152, %c1_153, %c0_154, %c0_155], %95 {strides = array<i32>} : memref<1x3x2x16x16xf32, #tpu.memory_space<vmem>>, vector<1x1x1x16x16xf32>,
    %96 = vector.extract_strided_slice %60 {offsets = [64, 0], sizes = [10, 10], strides = [1, 1]} : vector<96x10xf32> to vector<10x10xf32>
    %c0_156 = arith.constant 0 : index
    %c2_157 = arith.constant 2 : index
    %c0_158 = arith.constant 0 : index
    %c0_159 = arith.constant 0 : index
    %c0_160 = arith.constant 0 : index
    %97 = vector.load %arg8[%c0_156, %c2_157, %c0_158, %c0_159, %c0_160] : memref<1x3x2x10x10xf32, #tpu.memory_space<vmem>>, vector<1x1x1x10x10xf32>
    %98 = vector.shape_cast %97 : vector<1x1x1x10x10xf32> to vector<10x10xf32>
    %99 = vector.shape_cast %96 : vector<10x10xf32> to vector<1x1x1x10x10xf32>
    tpu.vector_store %arg8[%c0_156, %c2_157, %c0_158, %c0_159, %c0_160], %99 {strides = array<i32>} : memref<1x3x2x10x10xf32, #tpu.memory_space<vmem>>, vector<1x1x1x10x10xf32>,
    %100 = vector.extract_strided_slice %63 {offsets = [64, 0], sizes = [16, 16], strides = [1, 1]} : vector<96x16xf32> to vector<16x16xf32>
    %c0_161 = arith.constant 0 : index
    %c2_162 = arith.constant 2 : index
    %c0_163 = arith.constant 0 : index
    %c0_164 = arith.constant 0 : index
    %c0_165 = arith.constant 0 : index
    %101 = vector.load %arg9[%c0_161, %c2_162, %c0_163, %c0_164, %c0_165] : memref<1x3x2x16x16xf32, #tpu.memory_space<vmem>>, vector<1x1x1x16x16xf32>
    %102 = vector.shape_cast %101 : vector<1x1x1x16x16xf32> to vector<16x16xf32>
    %103 = vector.shape_cast %100 : vector<16x16xf32> to vector<1x1x1x16x16xf32>
    tpu.vector_store %arg9[%c0_161, %c2_162, %c0_163, %c0_164, %c0_165], %103 {strides = array<i32>} : memref<1x3x2x16x16xf32, #tpu.memory_space<vmem>>, vector<1x1x1x16x16xf32>,
    %104 = vector.extract_strided_slice %60 {offsets = [80, 0], sizes = [10, 10], strides = [1, 1]} : vector<96x10xf32> to vector<10x10xf32>
    %c0_166 = arith.constant 0 : index
    %c2_167 = arith.constant 2 : index
    %c1_168 = arith.constant 1 : index
    %c0_169 = arith.constant 0 : index
    %c0_170 = arith.constant 0 : index
    %105 = vector.load %arg8[%c0_166, %c2_167, %c1_168, %c0_169, %c0_170] : memref<1x3x2x10x10xf32, #tpu.memory_space<vmem>>, vector<1x1x1x10x10xf32>
    %106 = vector.shape_cast %105 : vector<1x1x1x10x10xf32> to vector<10x10xf32>
    %107 = vector.shape_cast %104 : vector<10x10xf32> to vector<1x1x1x10x10xf32>
    tpu.vector_store %arg8[%c0_166, %c2_167, %c1_168, %c0_169, %c0_170], %107 {strides = array<i32>} : memref<1x3x2x10x10xf32, #tpu.memory_space<vmem>>, vector<1x1x1x10x10xf32>,
    %108 = vector.extract_strided_slice %63 {offsets = [80, 0], sizes = [16, 16], strides = [1, 1]} : vector<96x16xf32> to vector<16x16xf32>
    %c0_171 = arith.constant 0 : index
    %c2_172 = arith.constant 2 : index
    %c1_173 = arith.constant 1 : index
    %c0_174 = arith.constant 0 : index
    %c0_175 = arith.constant 0 : index
    %109 = vector.load %arg9[%c0_171, %c2_172, %c1_173, %c0_174, %c0_175] : memref<1x3x2x16x16xf32, #tpu.memory_space<vmem>>, vector<1x1x1x16x16xf32>
    %110 = vector.shape_cast %109 : vector<1x1x1x16x16xf32> to vector<16x16xf32>
    %111 = vector.shape_cast %108 : vector<16x16xf32> to vector<1x1x1x16x16xf32>
    tpu.vector_store %arg9[%c0_171, %c2_172, %c1_173, %c0_174, %c0_175], %111 {strides = array<i32>} : memref<1x3x2x16x16xf32, #tpu.memory_space<vmem>>, vector<1x1x1x16x16xf32>,
    return
  }
  func.func @transform_0(%arg0: i32, %arg1: i32) -> (i32, i32) {
    %c0_i32 = arith.constant 0 : i32
    %c0_i32_0 = arith.constant 0 : i32
    %c0_i32_1 = arith.constant 0 : i32
    return %c0_i32, %c0_i32_0 : i32, i32
  }
  func.func @transform_1(%arg0: i32, %arg1: i32) -> (i32, i32) {
    %c0_i32 = arith.constant 0 : i32
    %c0_i32_0 = arith.constant 0 : i32
    %c0_i32_1 = arith.constant 0 : i32
    return %c0_i32, %c0_i32_0 : i32, i32
  }
  func.func @transform_2(%arg0: i32, %arg1: i32) -> (i32, i32) {
    %c0_i32 = arith.constant 0 : i32
    %c0_i32_0 = arith.constant 0 : i32
    %c0_i32_1 = arith.constant 0 : i32
    return %c0_i32, %c0_i32_0 : i32, i32
  }
  func.func @transform_3(%arg0: i32, %arg1: i32) -> (i32, i32) {
    %c0_i32 = arith.constant 0 : i32
    %c0_i32_0 = arith.constant 0 : i32
    %c0_i32_1 = arith.constant 0 : i32
    return %c0_i32, %c0_i32_0 : i32, i32
  }
  func.func @transform_4(%arg0: i32, %arg1: i32) -> (i32, i32, i32, i32, i32, i32) {
    %c0_i32 = arith.constant 0 : i32
    %c0_i32_0 = arith.constant 0 : i32
    %c0_i32_1 = arith.constant 0 : i32
    %c0_i32_2 = arith.constant 0 : i32
    %c0_i32_3 = arith.constant 0 : i32
    return %arg0, %arg1, %c0_i32, %c0_i32_0, %c0_i32_1, %c0_i32_2 : i32, i32, i32, i32, i32, i32
  }
  func.func @transform_5(%arg0: i32, %arg1: i32) -> (i32, i32, i32, i32, i32, i32) {
    %c2_i32 = arith.constant 2 : i32
    %c0_i32 = arith.constant 0 : i32
    %c0_i32_0 = arith.constant 0 : i32
    %c0_i32_1 = arith.constant 0 : i32
    %c0_i32_2 = arith.constant 0 : i32
    return %arg0, %arg1, %c2_i32, %c0_i32, %c0_i32_0, %c0_i32_1 : i32, i32, i32, i32, i32, i32
  }
  func.func @transform_6(%arg0: i32, %arg1: i32) -> (i32, i32, i32, i32, i32) {
    %c0_i32 = arith.constant 0 : i32
    %c0_i32_0 = arith.constant 0 : i32
    %c0_i32_1 = arith.constant 0 : i32
    %c0_i32_2 = arith.constant 0 : i32
    return %arg0, %c0_i32, %arg1, %c0_i32_0, %c0_i32_1 : i32, i32, i32, i32, i32
  }
  func.func @transform_7(%arg0: i32, %arg1: i32) -> (i32, i32, i32, i32, i32) {
    %c0_i32 = arith.constant 0 : i32
    %c0_i32_0 = arith.constant 0 : i32
    %c0_i32_1 = arith.constant 0 : i32
    %c0_i32_2 = arith.constant 0 : i32
    return %arg0, %c0_i32, %arg1, %c0_i32_0, %c0_i32_1 : i32, i32, i32, i32, i32
  }
}

</mosaic_0001>

<llo_original>
// kernel: net_forward.1
$region0: #{net_forward.1}
  #allocation0 [shape = 'u32[]', space=smem, size = 0x4, offset = 0x4, fixed_abs, tag = 'smem constant byte address 0x4 - core index']
  #allocation1 [shape = 'u32[144,128]{1,0:T(1,128)}', space=vmem, size = 0x12000, scoped, tag = 'internal scratch']
  #allocation2 [shape = 'f32[96,16]{1,0:T(8,128)}', space=vmem, size = 0xc000, scoped, tag = 'scratch operand']
  #allocation3 [shape = 'f32[96,16]{1,0:T(8,128)}', space=vmem, size = 0xc000, scoped, tag = 'scratch operand']
  #allocation16 [shape = 's32[]', space=sflag, size = 0x4, offset = 0, fixed_abs, tag = 'sflag constant byte address 0x0 - dummy sync flag']
  #allocation18 [shape = 's32[]', space=sflag, size = 0x4, offset = 0, fixed_abs, tag = 'sflag constant byte address 0x0 - dummy sync flag']
  #allocation20 [shape = 's32[]', space=sflag, size = 0x4, offset = 0, fixed_abs, tag = 'sflag constant byte address 0x0 - dummy sync flag']
  %s0 = inlined_call_operand.hbm [shape: f32[10,16], index: 0, kind: input, shape index: {}]
  %s1 = inlined_call_operand.hbm [shape: f32[16,10], index: 1, kind: input, shape index: {}]
  %s2 = inlined_call_operand.hbm [shape: f32[16,16], index: 2, kind: input, shape index: {}]
  %s3 = inlined_call_operand.hbm [shape: f32[16,16], index: 3, kind: input, shape index: {}]
  %s4 = inlined_call_operand.hbm [shape: f32[2,8,3,3,16,16], index: 4, kind: input, shape index: {}, may-alias: {4,5}]
  %s5 = inlined_call_operand.hbm [shape: f32[2,8,3,3,16,16], index: 5, kind: input, shape index: {}, may-alias: {4,5}]
  %s6 = inlined_call_operand.vmem [shape: f32[2,3,8,10,10], index: 6, kind: output, shape index: {0}]
  %s7 = inlined_call_operand.hbm [shape: f32[2,3,8,16,16], index: 7, kind: output, shape index: {1}]
  %8 = xla_tuple %s6, %s7
  %s9 = sld [smem:[#allocation0]]
  $region123: #{net_forward.1} parent=0
    _
  %s11 = ssub.s32 1, %s9
  %s12 = scalar_select 0, %s11, %s9
  $region1: #{net_forward.1} parent=0
    #allocation4 [shape = 'u8[8192]{0}', space=vmem, size = 0x2000, scoped, tag = 'input window, operand 0, single buffered']
    #allocation5 [shape = 's32[2]{0}', space=sflag, size = 0x8, scoped, tag = 'scoped memory for net_forward.1']
    #allocation6 [shape = 's32[2]{0}', space=sflag, size = 0x8, scoped, tag = 'scoped memory for net_forward.1']
    #allocation7 [shape = 'u8[8192]{0}', space=vmem, size = 0x2000, scoped, tag = 'input window, operand 1, single buffered']
    #allocation8 [shape = 's32[1]{0}', space=sflag, size = 0x4, scoped, tag = 'scoped memory for net_forward.1']
    #allocation9 [shape = 'u8[8192]{0}', space=vmem, size = 0x2000, scoped, tag = 'input window, operand 2, single buffered']
    #allocation10 [shape = 'u8[8192]{0}', space=vmem, size = 0x2000, scoped, tag = 'input window, operand 3, single buffered']
    #allocation11 [shape = 's32[1]{0}', space=sflag, size = 0x4, scoped, tag = 'scoped memory for net_forward.1']
    #allocation12 [shape = 'u8[98304]{0}', space=vmem, size = 0x18000, scoped, tag = 'input window, operand 4']
    #allocation13 [shape = 'u8[98304]{0}', space=vmem, size = 0x18000, scoped, tag = 'input window, operand 5']
    #allocation14 [shape = 'u8[98304]{0}', space=vmem, size = 0x18000, scoped, tag = 'output window, operand 0']
    #allocation15 [shape = 'u8[98304]{0}', space=vmem, size = 0x18000, scoped, tag = 'output window, operand 1']
    %13 = vsyncpa [#allocation5], 0
    %14 = vsyncpa [#allocation8], 0
    %15 = vsyncpa [#allocation11], 0
    %16 = vsyncpa [#allocation6], 0
    %s17 = scalar_lea.sflag [#allocation6], 1
    %18 = vsyncpa %s17, 0
    loop: start=0, step=1, limit=10
    $region2: #{net_forward.1} parent=1 // loop_pre_header
      _
    $region3: #{net_forward.1} parent=1 // loop_header
      %s20 = sphi 0, %s24
      %p21 = scmp.ge.s32.totalorder %s20, 10
      %s27 = sphi 0, %s39
      %s28 = sphi 0, %s35
      %s29 = sphi 0, %s27
      %s30 = sphi 0, %s28
      %s31 = sphi 0, %s29
      %s32 = sphi 0, %s30
      %s40 = sphi 0, %s40
      %s42 = sphi 0, %s40
      %s43 = sphi 0, %s42
      %s57 = sphi 0, %s43
      %s61 = sphi 0, %s61
      %s63 = sphi 0, %s61
      %s64 = sphi 0, %s63
      %s78 = sphi 0, %s64
      %s82 = sphi 0, %s82
      %s84 = sphi 0, %s82
      %s85 = sphi 0, %s84
      %s99 = sphi 0, %s85
      %s103 = sphi 0, %s103
      %s105 = sphi 0, %s103
      %s106 = sphi 0, %s105
      %s120 = sphi 0, %s106
      %s128 = sphi 0, %s130
      %s131 = sphi 0, %s128
      %s132 = sphi 0, %s131
      %s148 = sphi 0, %s132
      %s156 = sphi 0, %s158
      %s159 = sphi 0, %s156
      %s160 = sphi 0, %s159
      %s176 = sphi 0, %s160
      %s184 = sphi 0, %s186
      %s187 = sphi 0, %s184
      %s188 = sphi 0, %s187
      %s204 = sphi 0, %s188
      %s212 = sphi 0, %s214
      %s215 = sphi 0, %s212
      %s216 = sphi 0, %s215
      %s232 = sphi 0, %s216
    $region4: #{net_forward.1} parent=1 // loop_header_branch
      %23 = sbr.rel (%p21) target = $region8
    $region5: #{net_forward.1} parent=1 // loop_body
      %s25 = ssub.s32 %s20, 1
      %s26 = ssub.s32 %s20, 2
      %s33 = sadd.s32 1, %s28
      %p34 = scmp.ge.s32.totalorder %s33, 4
      %s35 = scalar_select %p34, 0, %s33
      %s36 = sadd.s32 1, %s27
      %s37 = scalar_select %p34, %s36, %s27
      %p38 = scmp.ge.s32.totalorder %s37, 2
      %s39 = scalar_select %p38, 0, %s37
      %s41 = sadd.s32 %s40, 1
      %p44 = scmp.eq.s32.totalorder %s20, 7
      %p45 = scmp.ne.s32.totalorder %s40, %s42
      %p46 = scmp.eq.s32.totalorder %s20, 0
      %p47 = por %p45, %p46
      %p48 = scmp.ne.s32.totalorder %s40, %s42
      %p49 = scmp.eq.s32.totalorder %s25, 7
      %p50 = por %p48, %p49
      %p51 = scmp.ne.s32.totalorder %s42, %s43
      %p52 = scmp.eq.s32.totalorder %s25, 0
      %p53 = por %p51, %p52
      %p54 = scmp.ne.s32.totalorder %s42, %s43
      %p55 = scmp.eq.s32.totalorder %s26, 7
      %p56 = por %p54, %p55
      %p58 = scmp.ne.s32.totalorder %s43, %s57
      %p59 = scmp.eq.s32.totalorder %s26, 0
      %p60 = por %p58, %p59
      %s62 = sadd.s32 %s61, 1
      %p65 = scmp.eq.s32.totalorder %s20, 7
      %p66 = scmp.ne.s32.totalorder %s61, %s63
      %p67 = scmp.eq.s32.totalorder %s20, 0
      %p68 = por %p66, %p67
      %p69 = scmp.ne.s32.totalorder %s61, %s63
      %p70 = scmp.eq.s32.totalorder %s25, 7
      %p71 = por %p69, %p70
      %p72 = scmp.ne.s32.totalorder %s63, %s64
      %p73 = scmp.eq.s32.totalorder %s25, 0
      %p74 = por %p72, %p73
      %p75 = scmp.ne.s32.totalorder %s63, %s64
      %p76 = scmp.eq.s32.totalorder %s26, 7
      %p77 = por %p75, %p76
      %p79 = scmp.ne.s32.totalorder %s64, %s78
      %p80 = scmp.eq.s32.totalorder %s26, 0
      %p81 = por %p79, %p80
      %s83 = sadd.s32 %s82, 1
      %p86 = scmp.eq.s32.totalorder %s20, 7
      %p87 = scmp.ne.s32.totalorder %s82, %s84
      %p88 = scmp.eq.s32.totalorder %s20, 0
      %p89 = por %p87, %p88
      %p90 = scmp.ne.s32.totalorder %s82, %s84
      %p91 = scmp.eq.s32.totalorder %s25, 7
      %p92 = por %p90, %p91
      %p93 = scmp.ne.s32.totalorder %s84, %s85
      %p94 = scmp.eq.s32.totalorder %s25, 0
      %p95 = por %p93, %p94
      %p96 = scmp.ne.s32.totalorder %s84, %s85
      %p97 = scmp.eq.s32.totalorder %s26, 7
      %p98 = por %p96, %p97
      %p100 = scmp.ne.s32.totalorder %s85, %s99
      %p101 = scmp.eq.s32.totalorder %s26, 0
      %p102 = por %p100, %p101
      %s104 = sadd.s32 %s103, 1
      %p107 = scmp.eq.s32.totalorder %s20, 7
      %p108 = scmp.ne.s32.totalorder %s103, %s105
      %p109 = scmp.eq.s32.totalorder %s20, 0
      %p110 = por %p108, %p109
      %p111 = scmp.ne.s32.totalorder %s103, %s105
      %p112 = scmp.eq.s32.totalorder %s25, 7
      %p113 = por %p111, %p112
      %p114 = scmp.ne.s32.totalorder %s105, %s106
      %p115 = scmp.eq.s32.totalorder %s25, 0
      %p116 = por %p114, %p115
      %p117 = scmp.ne.s32.totalorder %s105, %s106
      %p118 = scmp.eq.s32.totalorder %s26, 7
      %p119 = por %p117, %p118
      %p121 = scmp.ne.s32.totalorder %s106, %s120
      %p122 = scmp.eq.s32.totalorder %s26, 0
      %p123 = por %p121, %p122
      %s124 = ssub.s32 %s27, %s39
      %s125 = ssub.s32 %s28, %s35
      %s126 = sor.u32 %s124, %s125
      %p127 = scmp.eq.s32.totalorder %s126, 0
      %s129 = sadd.s32 %s128, 1
      %s130 = scalar_select %p127, %s128, %s129
      %p133 = pneg %p127
      %p134 = scmp.eq.s32.totalorder %s20, 7
      %p135 = por %p133, %p134
      %p136 = scmp.ne.s32.totalorder %s128, %s131
      %p137 = scmp.eq.s32.totalorder %s20, 0
      %p138 = por %p136, %p137
      %p139 = scmp.ne.s32.totalorder %s128, %s131
      %p140 = scmp.eq.s32.totalorder %s25, 7
      %p141 = por %p139, %p140
      %p142 = scmp.ne.s32.totalorder %s131, %s132
      %p143 = scmp.eq.s32.totalorder %s25, 0
      %p144 = por %p142, %p143
      %p145 = scmp.ne.s32.totalorder %s131, %s132
      %p146 = scmp.eq.s32.totalorder %s26, 7
      %p147 = por %p145, %p146
      %p149 = scmp.ne.s32.totalorder %s132, %s148
      %p150 = scmp.eq.s32.totalorder %s26, 0
      %p151 = por %p149, %p150
      %s152 = ssub.s32 %s27, %s39
      %s153 = ssub.s32 %s28, %s35
      %s154 = sor.u32 %s152, %s153
      %p155 = scmp.eq.s32.totalorder %s154, 0
      %s157 = sadd.s32 %s156, 1
      %s158 = scalar_select %p155, %s156, %s157
      %p161 = pneg %p155
      %p162 = scmp.eq.s32.totalorder %s20, 7
      %p163 = por %p161, %p162
      %p164 = scmp.ne.s32.totalorder %s156, %s159
      %p165 = scmp.eq.s32.totalorder %s20, 0
      %p166 = por %p164, %p165
      %p167 = scmp.ne.s32.totalorder %s156, %s159
      %p168 = scmp.eq.s32.totalorder %s25, 7
      %p169 = por %p167, %p168
      %p170 = scmp.ne.s32.totalorder %s159, %s160
      %p171 = scmp.eq.s32.totalorder %s25, 0
      %p172 = por %p170, %p171
      %p173 = scmp.ne.s32.totalorder %s159, %s160
      %p174 = scmp.eq.s32.totalorder %s26, 7
      %p175 = por %p173, %p174
      %p177 = scmp.ne.s32.totalorder %s160, %s176
      %p178 = scmp.eq.s32.totalorder %s26, 0
      %p179 = por %p177, %p178
      %s180 = ssub.s32 %s27, %s39
      %s181 = ssub.s32 %s28, %s35
      %s182 = sor.u32 %s180, %s181
      %p183 = scmp.eq.s32.totalorder %s182, 0
      %s185 = sadd.s32 %s184, 1
      %s186 = scalar_select %p183, %s184, %s185
      %p189 = pneg %p183
      %p190 = scmp.eq.s32.totalorder %s20, 7
      %p191 = por %p189, %p190
      %p192 = scmp.ne.s32.totalorder %s184, %s187
      %p193 = scmp.eq.s32.totalorder %s20, 0
      %p194 = por %p192, %p193
      %p195 = scmp.ne.s32.totalorder %s184, %s187
      %p196 = scmp.eq.s32.totalorder %s25, 7
      %p197 = por %p195, %p196
      %p198 = scmp.ne.s32.totalorder %s187, %s188
      %p199 = scmp.eq.s32.totalorder %s25, 0
      %p200 = por %p198, %p199
      %p201 = scmp.ne.s32.totalorder %s187, %s188
      %p202 = scmp.eq.s32.totalorder %s26, 7
      %p203 = por %p201, %p202
      %p205 = scmp.ne.s32.totalorder %s188, %s204
      %p206 = scmp.eq.s32.totalorder %s26, 0
      %p207 = por %p205, %p206
      %s208 = ssub.s32 %s27, %s39
      %s209 = ssub.s32 %s28, %s35
      %s210 = sor.u32 %s208, %s209
      %p211 = scmp.eq.s32.totalorder %s210, 0
      %s213 = sadd.s32 %s212, 1
      %s214 = scalar_select %p211, %s212, %s213
      %p217 = pneg %p211
      %p218 = scmp.eq.s32.totalorder %s20, 7
      %p219 = por %p217, %p218
      %p220 = scmp.ne.s32.totalorder %s212, %s215
      %p221 = scmp.eq.s32.totalorder %s20, 0
      %p222 = por %p220, %p221
      %p223 = scmp.ne.s32.totalorder %s212, %s215
      %p224 = scmp.eq.s32.totalorder %s25, 7
      %p225 = por %p223, %p224
      %p226 = scmp.ne.s32.totalorder %s215, %s216
      %p227 = scmp.eq.s32.totalorder %s25, 0
      %p228 = por %p226, %p227
      %p229 = scmp.ne.s32.totalorder %s215, %s216
      %p230 = scmp.eq.s32.totalorder %s26, 7
      %p231 = por %p229, %p230
      %p233 = scmp.ne.s32.totalorder %s216, %s232
      %p234 = scmp.eq.s32.totalorder %s26, 0
      %p235 = por %p233, %p234
      %p236 = scmp.le.s32.totalorder 1, %s20
      %p237 = scmp.lt.s32.totalorder %s20, 9
      %p238 = pnand %p236, %p237
      %p239 = pneg %p238
      // Predicated region
      $region9: #{net_forward.1} parent=5 // pred_check
        _
      $region10: #{net_forward.1} parent=5 // pred_check_branch
        %241 = sbr.rel (%p238) target = $region12
      $region11: #{net_forward.1} parent=5 // pred_region
        %s242 = ssub.s32 %s20, 1
        // Predicated region
        $region13: #{net_forward.1} parent=11 // pred_check
          %p243 = pneg %p53
        $region14: #{net_forward.1} parent=11 // pred_check_branch
          %245 = sbr.rel (%p243) target = $region16
        $region15: #{net_forward.1} parent=11 // pred_region
          %s247 = ssub.s32 256, 256
          %248 = vsyncadd [#allocation5], %s247
          %s249 = sshll.u32 [#allocation4], 4
          %s250 = int_to_ptr.vmem [resolvable:$true] %s249
          %255 = dma.hbm_to_vmem [thread:$0]  %s0, 256, %s250, [#allocation5], 128, 128, 8
        $region16: #{net_forward.1} parent=11 // pred_fallthru
          _
        // Predicated region
        $region17: #{net_forward.1} parent=11 // pred_check
          %p256 = pneg %p74
        $region18: #{net_forward.1} parent=11 // pred_check_branch
          %258 = sbr.rel (%p256) target = $region20
        $region19: #{net_forward.1} parent=11 // pred_region
          %s260 = ssub.s32 256, 256
          %261 = vsyncadd [#allocation8], %s260
          %s262 = sshll.u32 [#allocation7], 4
          %s263 = int_to_ptr.vmem [resolvable:$true] %s262
          %268 = dma.hbm_to_vmem [thread:$0]  %s1, 256, %s263, [#allocation8], 128, 128, 8
        $region20: #{net_forward.1} parent=11 // pred_fallthru
          _
        // Predicated region
        $region21: #{net_forward.1} parent=11 // pred_check
          %p269 = pneg %p95
        $region22: #{net_forward.1} parent=11 // pred_check_branch
          %271 = sbr.rel (%p269) target = $region24
        $region23: #{net_forward.1} parent=11 // pred_region
          %s273 = ssub.s32 256, 256
          %274 = vsyncadd [#allocation8], %s273
          %s275 = sshll.u32 [#allocation9], 4
          %s276 = int_to_ptr.vmem [resolvable:$true] %s275
          %281 = dma.hbm_to_vmem [thread:$0]  %s2, 256, %s276, [#allocation8], 128, 128, 8
        $region24: #{net_forward.1} parent=11 // pred_fallthru
          _
        // Predicated region
        $region25: #{net_forward.1} parent=11 // pred_check
          %p282 = pneg %p116
        $region26: #{net_forward.1} parent=11 // pred_check_branch
          %284 = sbr.rel (%p282) target = $region28
        $region27: #{net_forward.1} parent=11 // pred_region
          %s286 = ssub.s32 256, 256
          %287 = vsyncadd [#allocation11], %s286
          %s288 = sshll.u32 [#allocation10], 4
          %s289 = int_to_ptr.vmem [resolvable:$true] %s288
          %294 = dma.hbm_to_vmem [thread:$0]  %s3, 256, %s289, [#allocation11], 128, 128, 8
        $region28: #{net_forward.1} parent=11 // pred_fallthru
          _
      $region12: #{net_forward.1} parent=5 // pred_fallthru
        _
      %p295 = scmp.lt.s32.totalorder %s20, 8
      // Predicated region
      $region29: #{net_forward.1} parent=5 // pred_check
        %p296 = pneg %p295
      $region30: #{net_forward.1} parent=5 // pred_check_branch
        %298 = sbr.rel (%p296) target = $region32
      $region31: #{net_forward.1} parent=5 // pred_region
        // Predicated region
        $region33: #{net_forward.1} parent=31 // pred_check
          %p299 = pneg %p138
        $region34: #{net_forward.1} parent=31 // pred_check_branch
          %301 = sbr.rel (%p299) target = $region36
        $region35: #{net_forward.1} parent=31 // pred_region
          #allocation17 [shape = 'u32[6]{0}', space=smem, size = 0x18, scoped, tag = 'DMA stride descriptor']
          %s302 = sand.u32 %s20, 1
          %s303 = scalar_lea.sflag [#allocation5], %s302
          %s304 = sand.u32 %s128, 1
          %s305 = smul.addr %s304, 96
          %s306 = scalar_lea.vmem [#allocation12], %s305
          %s307 = smul.u32 2, %s28
          %s309 = ssub.s32 1536, 1536
          %310 = vsyncadd %s303, %s309
          %s311 = smul.addr %s307, 18
          %s312 = smul.addr %s27, 144
          %s313 = sadd.s32 %s311, %s312
          %s314 = smul.addr %s313, 128
          %s315 = scalar_lea.hbm %s4, %s314
          %s317 = sshll.u32 1, 14
          %s318 = sxor.u32 4294967295, %s317
          %s320 = sld [smem:[#allocation0]]
          %s321 = sadd.s32 2, %s320
          %s323 = sshll.u32 7, 26
          %s324 = sxor.u32 4294967295, %s323
          %s325 = sand.u32 0, %s324
          %s326 = sshll.u32 %s321, 26
          %s327 = sor.u32 %s325, %s326
          %s328 = sshll.u32 %s306, 4
          %s329 = int_to_ptr.vmem [resolvable:$true] %s328
          %335 = sst [smem:[#allocation17]] 2304
          %s336 = scalar_lea.smem [#allocation17], 1
          %337 = sst [smem:[%s336]] 768
          %s338 = scalar_lea.smem [#allocation17], 2
          %339 = sst [smem:[%s338]] 6
          %s340 = scalar_lea.smem [#allocation17], 3
          %341 = sst [smem:[%s340]] 128
          %s342 = scalar_lea.smem [#allocation17], 4
          %343 = sst [smem:[%s342]] 128
          %s344 = scalar_lea.smem [#allocation17], 5
          %345 = sst [smem:[%s344]] 8
          %347 = dma.general %s315, 1536, %s329, %s303, 131072, [#allocation17], %s327, 0
        $region36: #{net_forward.1} parent=31 // pred_fallthru
          _
        // Predicated region
        $region37: #{net_forward.1} parent=31 // pred_check
          %p348 = pneg %p166
        $region38: #{net_forward.1} parent=31 // pred_check_branch
          %350 = sbr.rel (%p348) target = $region40
        $region39: #{net_forward.1} parent=31 // pred_region
          #allocation19 [shape = 'u32[6]{0}', space=smem, size = 0x18, scoped, tag = 'DMA stride descriptor']
          %s351 = sand.u32 %s20, 1
          %s352 = scalar_lea.sflag [#allocation5], %s351
          %s353 = sand.u32 %s156, 1
          %s354 = smul.addr %s353, 96
          %s355 = scalar_lea.vmem [#allocation13], %s354
          %s356 = smul.u32 2, %s28
          %s358 = ssub.s32 1536, 1536
          %359 = vsyncadd %s352, %s358
          %s360 = smul.addr %s356, 18
          %s361 = sadd.s32 12, %s360
          %s362 = smul.addr %s27, 144
          %s363 = sadd.s32 %s361, %s362
          %s364 = smul.addr %s363, 128
          %s365 = scalar_lea.hbm %s5, %s364
          %s367 = sshll.u32 1, 14
          %s368 = sxor.u32 4294967295, %s367
          %s370 = sld [smem:[#allocation0]]
          %s371 = sadd.s32 2, %s370
          %s373 = sshll.u32 7, 26
          %s374 = sxor.u32 4294967295, %s373
          %s375 = sand.u32 0, %s374
          %s376 = sshll.u32 %s371, 26
          %s377 = sor.u32 %s375, %s376
          %s378 = sshll.u32 %s355, 4
          %s379 = int_to_ptr.vmem [resolvable:$true] %s378
          %385 = sst [smem:[#allocation19]] 2304
          %s386 = scalar_lea.smem [#allocation19], 1
          %387 = sst [smem:[%s386]] 768
          %s388 = scalar_lea.smem [#allocation19], 2
          %389 = sst [smem:[%s388]] 6
          %s390 = scalar_lea.smem [#allocation19], 3
          %391 = sst [smem:[%s390]] 128
          %s392 = scalar_lea.smem [#allocation19], 4
          %393 = sst [smem:[%s392]] 128
          %s394 = scalar_lea.smem [#allocation19], 5
          %395 = sst [smem:[%s394]] 8
          %397 = dma.general %s365, 1536, %s379, %s352, 131072, [#allocation19], %s377, 0
        $region40: #{net_forward.1} parent=31 // pred_fallthru
          _
      $region32: #{net_forward.1} parent=5 // pred_fallthru
        _
      %p398 = scmp.le.s32.totalorder 1, %s20
      %p399 = scmp.lt.s32.totalorder %s20, 9
      %p400 = pnand %p398, %p399
      %p401 = pneg %p400
      // Predicated region
      $region41: #{net_forward.1} parent=5 // pred_check
        _
      $region42: #{net_forward.1} parent=5 // pred_check_branch
        %403 = sbr.rel (%p400) target = $region44
      $region43: #{net_forward.1} parent=5 // pred_region
        %s404 = ssub.s32 %s20, 1
        // Predicated region
        $region45: #{net_forward.1} parent=43 // pred_check
          %p405 = pneg %p53
        $region46: #{net_forward.1} parent=43 // pred_check_branch
          %407 = sbr.rel (%p405) target = $region48
        $region47: #{net_forward.1} parent=43 // pred_region
          %408 = dma.done [#allocation5], 256
        $region48: #{net_forward.1} parent=43 // pred_fallthru
          _
        // Predicated region
        $region49: #{net_forward.1} parent=43 // pred_check
          %p409 = pneg %p74
        $region50: #{net_forward.1} parent=43 // pred_check_branch
          %411 = sbr.rel (%p409) target = $region52
        $region51: #{net_forward.1} parent=43 // pred_region
          %412 = dma.done [#allocation8], 256
        $region52: #{net_forward.1} parent=43 // pred_fallthru
          _
        // Predicated region
        $region53: #{net_forward.1} parent=43 // pred_check
          %p413 = pneg %p95
        $region54: #{net_forward.1} parent=43 // pred_check_branch
          %415 = sbr.rel (%p413) target = $region56
        $region55: #{net_forward.1} parent=43 // pred_region
          %416 = dma.done [#allocation8], 256
        $region56: #{net_forward.1} parent=43 // pred_fallthru
          _
        // Predicated region
        $region57: #{net_forward.1} parent=43 // pred_check
          %p417 = pneg %p116
        $region58: #{net_forward.1} parent=43 // pred_check_branch
          %419 = sbr.rel (%p417) target = $region60
        $region59: #{net_forward.1} parent=43 // pred_region
          %420 = dma.done [#allocation11], 256
        $region60: #{net_forward.1} parent=43 // pred_fallthru
          _
        %s421 = sand.u32 %s25, 1
        %s422 = scalar_lea.sflag [#allocation5], %s421
        %s423 = sand.u32 %s131, 1
        %s424 = smul.addr %s423, 96
        %s425 = scalar_lea.vmem [#allocation12], %s424
        // Predicated region
        $region61: #{net_forward.1} parent=43 // pred_check
          %p426 = pneg %p144
        $region62: #{net_forward.1} parent=43 // pred_check_branch
          %428 = sbr.rel (%p426) target = $region64
        $region63: #{net_forward.1} parent=43 // pred_region
          %429 = dma.done %s422, 1536
        $region64: #{net_forward.1} parent=43 // pred_fallthru
          _
        %s430 = sand.u32 %s25, 1
        %s431 = scalar_lea.sflag [#allocation5], %s430
        %s432 = sand.u32 %s159, 1
        %s433 = smul.addr %s432, 96
        %s434 = scalar_lea.vmem [#allocation13], %s433
        // Predicated region
        $region65: #{net_forward.1} parent=43 // pred_check
          %p435 = pneg %p172
        $region66: #{net_forward.1} parent=43 // pred_check_branch
          %437 = sbr.rel (%p435) target = $region68
        $region67: #{net_forward.1} parent=43 // pred_region
          %438 = dma.done %s431, 1536
        $region68: #{net_forward.1} parent=43 // pred_fallthru
          _
        %p439 = pneg %p53
        %p440 = pneg %p50
        %p441 = pneg %p74
        %p442 = pneg %p71
        %p443 = pneg %p95
        %p444 = pneg %p92
        %p445 = pneg %p116
        %p446 = pneg %p113
        %s447 = sand.u32 %s25, 1
        %s448 = scalar_lea.sflag [#allocation5], %s447
        %s449 = sand.u32 %s131, 1
        %s450 = smul.addr %s449, 96
        %s451 = scalar_lea.vmem [#allocation12], %s450
        %p452 = pneg %p144
        %p453 = pneg %p141
        %s454 = sand.u32 %s25, 1
        %s455 = scalar_lea.sflag [#allocation5], %s454
        %s456 = sand.u32 %s159, 1
        %s457 = smul.addr %s456, 96
        %s458 = scalar_lea.vmem [#allocation13], %s457
        %p459 = pneg %p172
        %p460 = pneg %p169
        %p461 = pneg %p200
        %p462 = pneg %p197
        %s463 = sand.u32 %s187, 1
        %s464 = sand.u32 %s187, 1
        %s465 = smul.addr %s464, 96
        %s466 = scalar_lea.vmem [#allocation14], %s465
        %p467 = pneg %p228
        %p468 = pneg %p225
        %s469 = sand.u32 %s215, 1
        %s470 = scalar_lea.sflag [#allocation6], %s469
        %s471 = sand.u32 %s215, 1
        %s472 = smul.addr %s471, 96
        %s473 = scalar_lea.vmem [#allocation15], %s472
        %s474 = smul.u32 2, %s30
        %s475 = smul.u32 2, %s30
        %s476 = smul.u32 2, %s30
        %s477 = smul.u32 2, %s30
        %v478 = vld [vmem:[#allocation4] sm:$0xff]
        %v479 = vld [vmem:[#allocation4 + $0x8] sm:$0x3]
        %v480 = vld [vmem:[#allocation9] sm:$0xff]
        %v481 = vld [vmem:[#allocation9 + $0x8] sm:$0xff]
        %vm482 = vcmask 130048
        %483 = vst.msk [vmem:[#allocation2] sm:$0xff] %vm482, 0.0
        %484 = vst.msk [vmem:[#allocation2 + $0x8] sm:$0xff] %vm482, 0.0
        %485 = vst.msk [vmem:[#allocation2 + $0x10] sm:$0xff] %vm482, 0.0
        %486 = vst.msk [vmem:[#allocation2 + $0x18] sm:$0xff] %vm482, 0.0
        %487 = vst.msk [vmem:[#allocation2 + $0x20] sm:$0xff] %vm482, 0.0
        %488 = vst.msk [vmem:[#allocation2 + $0x28] sm:$0xff] %vm482, 0.0
        %489 = vst.msk [vmem:[#allocation2 + $0x30] sm:$0xff] %vm482, 0.0
        %490 = vst.msk [vmem:[#allocation2 + $0x38] sm:$0xff] %vm482, 0.0
        %491 = vst.msk [vmem:[#allocation2 + $0x40] sm:$0xff] %vm482, 0.0
        %492 = vst.msk [vmem:[#allocation2 + $0x48] sm:$0xff] %vm482, 0.0
        %493 = vst.msk [vmem:[#allocation2 + $0x50] sm:$0xff] %vm482, 0.0
        %494 = vst.msk [vmem:[#allocation2 + $0x58] sm:$0xff] %vm482, 0.0
        %v495 = vld [vmem:[%s425] sm:$0xff]
        %v496 = vld [vmem:[%s425 + $0x8] sm:$0xff]
        %v497 = vld [vmem:[%s434] sm:$0xff]
        %v498 = vld [vmem:[%s434 + $0x8] sm:$0xff]
        %v499 = vsub.f32 %v497, %v495
        %v500 = vsub.f32 %v498, %v496
        %v502 = vsel %vm482, %v478, 0
        %v505 = vsel %vm482, %v479, 0
        %507 = vmatprep.subr.mxu0 0.0
        %508 = vmatpush1.msra.mxu0 0.0
        %509 = vmatprep.subr.mxu0 0.0
        %510 = vmatpush1.msra.mxu0 0.0
        %511 = vmatprep.subr.mxu0 0.0
        %512 = vmatpush1.msra.mxu0 0.0
        %513 = vmatprep.subr.mxu0 0.0
        %514 = vmatpush1.msra.mxu0 0.0
        %515 = vmatprep.subr.mxu0 0.0
        %516 = vmatpush1.msra.mxu0 0.0
        %517 = vmatprep.subr.mxu0 0.0
        %518 = vmatpush1.msra.mxu0 0.0
        %519 = vmatprep.subr.mxu0 0.0
        %520 = vmatpush1.msra.mxu0 0.0
        %521 = vmatprep.subr.mxu0 0.0
        %522 = vmatpush1.msra.mxu0 0.0
        %523 = vmatprep.subr.mxu0 0.0
        %524 = vmatpush1.msra.mxu0 0.0
        %525 = vmatprep.subr.mxu0 0.0
        %526 = vmatpush1.msra.mxu0 0.0
        %527 = vmatprep.subr.mxu0 0.0
        %528 = vmatpush1.msra.mxu0 0.0
        %529 = vmatprep.subr.mxu0 0.0
        %530 = vmatpush1.msra.mxu0 0.0
        %531 = vmatprep.subr.mxu0 0.0
        %532 = vmatpush1.msra.mxu0 0.0
        %533 = vmatprep.subr.mxu0 0.0
        %534 = vmatpush1.msra.mxu0 0.0
        %535 = vmatprep.subr.mxu0 0.0
        %536 = vmatpush1.msra.mxu0 %v496
        %537 = vmatprep.subr.mxu0 0.0
        %538 = vmatpush1.msra.mxu0 %v495
        %539 = vmatprep.subr.mxu0 0.0
        %540 = vmatpush2.msra.mxu0 0.0
        %541 = vmatprep.subr.mxu0 0.0
        %542 = vmatpush2.msra.mxu0 0.0
        %543 = vmatprep.subr.mxu0 0.0
        %544 = vmatpush2.msra.mxu0 0.0
        %545 = vmatprep.subr.mxu0 0.0
        %546 = vmatpush2.msra.mxu0 0.0
        %547 = vmatprep.subr.mxu0 0.0
        %548 = vmatpush2.msra.mxu0 0.0
        %549 = vmatprep.subr.mxu0 0.0
        %550 = vmatpush2.msra.mxu0 0.0
        %551 = vmatprep.subr.mxu0 0.0
        %552 = vmatpush2.msra.mxu0 0.0
        %553 = vmatprep.subr.mxu0 0.0
        %554 = vmatpush2.msra.mxu0 0.0
        %555 = vmatprep.subr.mxu0 0.0
        %556 = vmatpush2.msra.mxu0 0.0
        %557 = vmatprep.subr.mxu0 0.0
        %558 = vmatpush2.msra.mxu0 0.0
        %559 = vmatprep.subr.mxu0 0.0
        %560 = vmatpush2.msra.mxu0 0.0
        %561 = vmatprep.subr.mxu0 0.0
        %562 = vmatpush2.msra.mxu0 0.0
        %563 = vmatprep.subr.mxu0 0.0
        %564 = vmatpush2.msra.mxu0 0.0
        %565 = vmatprep.subr.mxu0 0.0
        %566 = vmatpush2.msra.mxu0 0.0
        %567 = vmatprep.subr.mxu0 0.0
        %568 = vmatpush2.msra.mxu0 0.0
        %569 = vmatprep.subr.mxu0 0.0
        %570 = vmatpush2.msra.mxu0 0.0
        %571 = vmatprep.mubr.f32.mxu0 0.0
        %572 = vmatmul.mubr.f32.gmra.mxu0 %v502
        %v573 = vpop.f32.mrf.mxu0
        %v574 = vadd.f32 0.0, %v573
        %v575 = vpop.f32.mrf.mxu0
        %576 = vmatprep.mubr.f32.mxu0 0.0
        %577 = vmatmul.mubr.f32.gmra.mxu0 %v505
        %v578 = vpop.f32.mrf.mxu0
        %v579 = vadd.f32 0.0, %v578
        %v580 = vpop.f32.mrf.mxu0
        %581 = vdwg.mxu0
        %582 = vst.msk [vmem:[#allocation2] sm:$0xff] %vm482, %v574
        %vm583 = vcmask 123904
        %584 = vst.msk [vmem:[#allocation2 + $0x8] sm:$0x3] %vm583, %v579
        %v586 = vsel %vm482, %v480, 0
        %v589 = vsel %vm482, %v481, 0
        %591 = vmatprep.subr.mxu0 0.0
        %592 = vmatpush1.msra.mxu0 0.0
        %593 = vmatprep.subr.mxu0 0.0
        %594 = vmatpush1.msra.mxu0 0.0
        %595 = vmatprep.subr.mxu0 0.0
        %596 = vmatpush1.msra.mxu0 0.0
        %597 = vmatprep.subr.mxu0 0.0
        %598 = vmatpush1.msra.mxu0 0.0
        %599 = vmatprep.subr.mxu0 0.0
        %600 = vmatpush1.msra.mxu0 0.0
        %601 = vmatprep.subr.mxu0 0.0
        %602 = vmatpush1.msra.mxu0 0.0
        %603 = vmatprep.subr.mxu0 0.0
        %604 = vmatpush1.msra.mxu0 0.0
        %605 = vmatprep.subr.mxu0 0.0
        %606 = vmatpush1.msra.mxu0 0.0
        %607 = vmatprep.subr.mxu0 0.0
        %608 = vmatpush1.msra.mxu0 0.0
        %609 = vmatprep.subr.mxu0 0.0
        %610 = vmatpush1.msra.mxu0 0.0
        %611 = vmatprep.subr.mxu0 0.0
        %612 = vmatpush1.msra.mxu0 0.0
        %613 = vmatprep.subr.mxu0 0.0
        %614 = vmatpush1.msra.mxu0 0.0
        %615 = vmatprep.subr.mxu0 0.0
        %616 = vmatpush1.msra.mxu0 0.0
        %617 = vmatprep.subr.mxu0 0.0
        %618 = vmatpush1.msra.mxu0 0.0
        %619 = vmatprep.subr.mxu0 0.0
        %620 = vmatpush1.msra.mxu0 %v500
        %621 = vmatprep.subr.mxu0 0.0
        %622 = vmatpush1.msra.mxu0 %v499
        %623 = vmatprep.subr.mxu0 0.0
        %624 = vmatpush2.msra.mxu0 0.0
        %625 = vmatprep.subr.mxu0 0.0
        %626 = vmatpush2.msra.mxu0 0.0
        %627 = vmatprep.subr.mxu0 0.0
        %628 = vmatpush2.msra.mxu0 0.0
        %629 = vmatprep.subr.mxu0 0.0
        %630 = vmatpush2.msra.mxu0 0.0
        %631 = vmatprep.subr.mxu0 0.0
        %632 = vmatpush2.msra.mxu0 0.0
        %633 = vmatprep.subr.mxu0 0.0
        %634 = vmatpush2.msra.mxu0 0.0
        %635 = vmatprep.subr.mxu0 0.0
        %636 = vmatpush2.msra.mxu0 0.0
        %637 = vmatprep.subr.mxu0 0.0
        %638 = vmatpush2.msra.mxu0 0.0
        %639 = vmatprep.subr.mxu0 0.0
        %640 = vmatpush2.msra.mxu0 0.0
        %641 = vmatprep.subr.mxu0 0.0
        %642 = vmatpush2.msra.mxu0 0.0
        %643 = vmatprep.subr.mxu0 0.0
        %644 = vmatpush2.msra.mxu0 0.0
        %645 = vmatprep.subr.mxu0 0.0
        %646 = vmatpush2.msra.mxu0 0.0
        %647 = vmatprep.subr.mxu0 0.0
        %648 = vmatpush2.msra.mxu0 0.0
        %649 = vmatprep.subr.mxu0 0.0
        %650 = vmatpush2.msra.mxu0 0.0
        %651 = vmatprep.subr.mxu0 0.0
        %652 = vmatpush2.msra.mxu0 0.0
        %653 = vmatprep.subr.mxu0 0.0
        %654 = vmatpush2.msra.mxu0 0.0
        %655 = vmatprep.mubr.f32.mxu0 0.0
        %656 = vmatmul.mubr.f32.gmra.mxu0 %v586
        %v657 = vpop.f32.mrf.mxu0
        %v658 = vadd.f32 0.0, %v657
        %v659 = vpop.f32.mrf.mxu0
        %660 = vmatprep.mubr.f32.mxu0 0.0
        %661 = vmatmul.mubr.f32.gmra.mxu0 %v589
        %v662 = vpop.f32.mrf.mxu0
        %v663 = vadd.f32 0.0, %v662
        %v664 = vpop.f32.mrf.mxu0
        %665 = vdwg.mxu0
        %666 = vst.msk [vmem:[#allocation3] sm:$0xff] %vm482, %v658
        %667 = vst.msk [vmem:[#allocation3 + $0x8] sm:$0xff] %vm482, %v663
        %s668 = scalar_lea.vmem %s425, 48 [#allocation12]
        %v669 = vld [vmem:[%s668] sm:$0xff]
        %v670 = vld [vmem:[%s668 + $0x8] sm:$0xff]
        %s671 = scalar_lea.vmem %s434, 48 [#allocation13]
        %v672 = vld [vmem:[%s671] sm:$0xff]
        %v673 = vld [vmem:[%s671 + $0x8] sm:$0xff]
        %v674 = vsub.f32 %v672, %v669
        %v675 = vsub.f32 %v673, %v670
        %676 = vmatprep.subr.mxu0 0.0
        %677 = vmatpush1.msra.mxu0 0.0
        %678 = vmatprep.subr.mxu0 0.0
        %679 = vmatpush1.msra.mxu0 0.0
        %680 = vmatprep.subr.mxu0 0.0
        %681 = vmatpush1.msra.mxu0 0.0
        %682 = vmatprep.subr.mxu0 0.0
        %683 = vmatpush1.msra.mxu0 0.0
        %684 = vmatprep.subr.mxu0 0.0
        %685 = vmatpush1.msra.mxu0 0.0
        %686 = vmatprep.subr.mxu0 0.0
        %687 = vmatpush1.msra.mxu0 0.0
        %688 = vmatprep.subr.mxu0 0.0
        %689 = vmatpush1.msra.mxu0 0.0
        %690 = vmatprep.subr.mxu0 0.0
        %691 = vmatpush1.msra.mxu0 0.0
        %692 = vmatprep.subr.mxu0 0.0
        %693 = vmatpush1.msra.mxu0 0.0
        %694 = vmatprep.subr.mxu0 0.0
        %695 = vmatpush1.msra.mxu0 0.0
        %696 = vmatprep.subr.mxu0 0.0
        %697 = vmatpush1.msra.mxu0 0.0
        %698 = vmatprep.subr.mxu0 0.0
        %699 = vmatpush1.msra.mxu0 0.0
        %700 = vmatprep.subr.mxu0 0.0
        %701 = vmatpush1.msra.mxu0 0.0
        %702 = vmatprep.subr.mxu0 0.0
        %703 = vmatpush1.msra.mxu0 0.0
        %704 = vmatprep.subr.mxu0 0.0
        %705 = vmatpush1.msra.mxu0 %v670
        %706 = vmatprep.subr.mxu0 0.0
        %707 = vmatpush1.msra.mxu0 %v669
        %708 = vmatprep.subr.mxu0 0.0
        %709 = vmatpush2.msra.mxu0 0.0
        %710 = vmatprep.subr.mxu0 0.0
        %711 = vmatpush2.msra.mxu0 0.0
        %712 = vmatprep.subr.mxu0 0.0
        %713 = vmatpush2.msra.mxu0 0.0
        %714 = vmatprep.subr.mxu0 0.0
        %715 = vmatpush2.msra.mxu0 0.0
        %716 = vmatprep.subr.mxu0 0.0
        %717 = vmatpush2.msra.mxu0 0.0
        %718 = vmatprep.subr.mxu0 0.0
        %719 = vmatpush2.msra.mxu0 0.0
        %720 = vmatprep.subr.mxu0 0.0
        %721 = vmatpush2.msra.mxu0 0.0
        %722 = vmatprep.subr.mxu0 0.0
        %723 = vmatpush2.msra.mxu0 0.0
        %724 = vmatprep.subr.mxu0 0.0
        %725 = vmatpush2.msra.mxu0 0.0
        %726 = vmatprep.subr.mxu0 0.0
        %727 = vmatpush2.msra.mxu0 0.0
        %728 = vmatprep.subr.mxu0 0.0
        %729 = vmatpush2.msra.mxu0 0.0
        %730 = vmatprep.subr.mxu0 0.0
        %731 = vmatpush2.msra.mxu0 0.0
        %732 = vmatprep.subr.mxu0 0.0
        %733 = vmatpush2.msra.mxu0 0.0
        %734 = vmatprep.subr.mxu0 0.0
        %735 = vmatpush2.msra.mxu0 0.0
        %736 = vmatprep.subr.mxu0 0.0
        %737 = vmatpush2.msra.mxu0 0.0
        %738 = vmatprep.subr.mxu0 0.0
        %739 = vmatpush2.msra.mxu0 0.0
        %740 = vmatprep.mubr.f32.mxu0 0.0
        %741 = vmatmul.mubr.f32.gmra.mxu0 %v502
        %v742 = vpop.f32.mrf.mxu0
        %v743 = vadd.f32 0.0, %v742
        %v744 = vpop.f32.mrf.mxu0
        %745 = vmatprep.mubr.f32.mxu0 0.0
        %746 = vmatmul.mubr.f32.gmra.mxu0 %v505
        %v747 = vpop.f32.mrf.mxu0
        %v748 = vadd.f32 0.0, %v747
        %v749 = vpop.f32.mrf.mxu0
        %750 = vdwg.mxu0
        %751 = vst.msk [vmem:[#allocation2 + $0x10] sm:$0xff] %vm482, %v743
        %752 = vst.msk [vmem:[#allocation2 + $0x18] sm:$0x3] %vm583, %v748
        %753 = vmatprep.subr.mxu0 0.0
        %754 = vmatpush1.msra.mxu0 0.0
        %755 = vmatprep.subr.mxu0 0.0
        %756 = vmatpush1.msra.mxu0 0.0
        %757 = vmatprep.subr.mxu0 0.0
        %758 = vmatpush1.msra.mxu0 0.0
        %759 = vmatprep.subr.mxu0 0.0
        %760 = vmatpush1.msra.mxu0 0.0
        %761 = vmatprep.subr.mxu0 0.0
        %762 = vmatpush1.msra.mxu0 0.0
        %763 = vmatprep.subr.mxu0 0.0
        %764 = vmatpush1.msra.mxu0 0.0
        %765 = vmatprep.subr.mxu0 0.0
        %766 = vmatpush1.msra.mxu0 0.0
        %767 = vmatprep.subr.mxu0 0.0
        %768 = vmatpush1.msra.mxu0 0.0
        %769 = vmatprep.subr.mxu0 0.0
        %770 = vmatpush1.msra.mxu0 0.0
        %771 = vmatprep.subr.mxu0 0.0
        %772 = vmatpush1.msra.mxu0 0.0
        %773 = vmatprep.subr.mxu0 0.0
        %774 = vmatpush1.msra.mxu0 0.0
        %775 = vmatprep.subr.mxu0 0.0
        %776 = vmatpush1.msra.mxu0 0.0
        %777 = vmatprep.subr.mxu0 0.0
        %778 = vmatpush1.msra.mxu0 0.0
        %779 = vmatprep.subr.mxu0 0.0
        %780 = vmatpush1.msra.mxu0 0.0
        %781 = vmatprep.subr.mxu0 0.0
        %782 = vmatpush1.msra.mxu0 %v675
        %783 = vmatprep.subr.mxu0 0.0
        %784 = vmatpush1.msra.mxu0 %v674
        %785 = vmatprep.subr.mxu0 0.0
        %786 = vmatpush2.msra.mxu0 0.0
        %787 = vmatprep.subr.mxu0 0.0
        %788 = vmatpush2.msra.mxu0 0.0
        %789 = vmatprep.subr.mxu0 0.0
        %790 = vmatpush2.msra.mxu0 0.0
        %791 = vmatprep.subr.mxu0 0.0
        %792 = vmatpush2.msra.mxu0 0.0
        %793 = vmatprep.subr.mxu0 0.0
        %794 = vmatpush2.msra.mxu0 0.0
        %795 = vmatprep.subr.mxu0 0.0
        %796 = vmatpush2.msra.mxu0 0.0
        %797 = vmatprep.subr.mxu0 0.0
        %798 = vmatpush2.msra.mxu0 0.0
        %799 = vmatprep.subr.mxu0 0.0
        %800 = vmatpush2.msra.mxu0 0.0
        %801 = vmatprep.subr.mxu0 0.0
        %802 = vmatpush2.msra.mxu0 0.0
        %803 = vmatprep.subr.mxu0 0.0
        %804 = vmatpush2.msra.mxu0 0.0
        %805 = vmatprep.subr.mxu0 0.0
        %806 = vmatpush2.msra.mxu0 0.0
        %807 = vmatprep.subr.mxu0 0.0
        %808 = vmatpush2.msra.mxu0 0.0
        %809 = vmatprep.subr.mxu0 0.0
        %810 = vmatpush2.msra.mxu0 0.0
        %811 = vmatprep.subr.mxu0 0.0
        %812 = vmatpush2.msra.mxu0 0.0
        %813 = vmatprep.subr.mxu0 0.0
        %814 = vmatpush2.msra.mxu0 0.0
        %815 = vmatprep.subr.mxu0 0.0
        %816 = vmatpush2.msra.mxu0 0.0
        %817 = vmatprep.mubr.f32.mxu0 0.0
        %818 = vmatmul.mubr.f32.gmra.mxu0 %v586
        %v819 = vpop.f32.mrf.mxu0
        %v820 = vadd.f32 0.0, %v819
        %v821 = vpop.f32.mrf.mxu0
        %822 = vmatprep.mubr.f32.mxu0 0.0
        %823 = vmatmul.mubr.f32.gmra.mxu0 %v589
        %v824 = vpop.f32.mrf.mxu0
        %v825 = vadd.f32 0.0, %v824
        %v826 = vpop.f32.mrf.mxu0
        %827 = vdwg.mxu0
        %828 = vst.msk [vmem:[#allocation3 + $0x10] sm:$0xff] %vm482, %v820
        %829 = vst.msk [vmem:[#allocation3 + $0x18] sm:$0xff] %vm482, %v825
        %s830 = scalar_lea.vmem %s425, 16 [#allocation12]
        %v831 = vld [vmem:[%s830] sm:$0xff]
        %v832 = vld [vmem:[%s830 + $0x8] sm:$0xff]
        %s833 = scalar_lea.vmem %s434, 16 [#allocation13]
        %v834 = vld [vmem:[%s833] sm:$0xff]
        %v835 = vld [vmem:[%s833 + $0x8] sm:$0xff]
        %v836 = vsub.f32 %v834, %v831
        %v837 = vsub.f32 %v835, %v832
        %838 = vmatprep.subr.mxu0 0.0
        %839 = vmatpush1.msra.mxu0 0.0
        %840 = vmatprep.subr.mxu0 0.0
        %841 = vmatpush1.msra.mxu0 0.0
        %842 = vmatprep.subr.mxu0 0.0
        %843 = vmatpush1.msra.mxu0 0.0
        %844 = vmatprep.subr.mxu0 0.0
        %845 = vmatpush1.msra.mxu0 0.0
        %846 = vmatprep.subr.mxu0 0.0
        %847 = vmatpush1.msra.mxu0 0.0
        %848 = vmatprep.subr.mxu0 0.0
        %849 = vmatpush1.msra.mxu0 0.0
        %850 = vmatprep.subr.mxu0 0.0
        %851 = vmatpush1.msra.mxu0 0.0
        %852 = vmatprep.subr.mxu0 0.0
        %853 = vmatpush1.msra.mxu0 0.0
        %854 = vmatprep.subr.mxu0 0.0
        %855 = vmatpush1.msra.mxu0 0.0
        %856 = vmatprep.subr.mxu0 0.0
        %857 = vmatpush1.msra.mxu0 0.0
        %858 = vmatprep.subr.mxu0 0.0
        %859 = vmatpush1.msra.mxu0 0.0
        %860 = vmatprep.subr.mxu0 0.0
        %861 = vmatpush1.msra.mxu0 0.0
        %862 = vmatprep.subr.mxu0 0.0
        %863 = vmatpush1.msra.mxu0 0.0
        %864 = vmatprep.subr.mxu0 0.0
        %865 = vmatpush1.msra.mxu0 0.0
        %866 = vmatprep.subr.mxu0 0.0
        %867 = vmatpush1.msra.mxu0 %v832
        %868 = vmatprep.subr.mxu0 0.0
        %869 = vmatpush1.msra.mxu0 %v831
        %870 = vmatprep.subr.mxu0 0.0
        %871 = vmatpush2.msra.mxu0 0.0
        %872 = vmatprep.subr.mxu0 0.0
        %873 = vmatpush2.msra.mxu0 0.0
        %874 = vmatprep.subr.mxu0 0.0
        %875 = vmatpush2.msra.mxu0 0.0
        %876 = vmatprep.subr.mxu0 0.0
        %877 = vmatpush2.msra.mxu0 0.0
        %878 = vmatprep.subr.mxu0 0.0
        %879 = vmatpush2.msra.mxu0 0.0
        %880 = vmatprep.subr.mxu0 0.0
        %881 = vmatpush2.msra.mxu0 0.0
        %882 = vmatprep.subr.mxu0 0.0
        %883 = vmatpush2.msra.mxu0 0.0
        %884 = vmatprep.subr.mxu0 0.0
        %885 = vmatpush2.msra.mxu0 0.0
        %886 = vmatprep.subr.mxu0 0.0
        %887 = vmatpush2.msra.mxu0 0.0
        %888 = vmatprep.subr.mxu0 0.0
        %889 = vmatpush2.msra.mxu0 0.0
        %890 = vmatprep.subr.mxu0 0.0
        %891 = vmatpush2.msra.mxu0 0.0
        %892 = vmatprep.subr.mxu0 0.0
        %893 = vmatpush2.msra.mxu0 0.0
        %894 = vmatprep.subr.mxu0 0.0
        %895 = vmatpush2.msra.mxu0 0.0
        %896 = vmatprep.subr.mxu0 0.0
        %897 = vmatpush2.msra.mxu0 0.0
        %898 = vmatprep.subr.mxu0 0.0
        %899 = vmatpush2.msra.mxu0 0.0
        %900 = vmatprep.subr.mxu0 0.0
        %901 = vmatpush2.msra.mxu0 0.0
        %902 = vmatprep.mubr.f32.mxu0 0.0
        %903 = vmatmul.mubr.f32.gmra.mxu0 %v502
        %v904 = vpop.f32.mrf.mxu0
        %v905 = vadd.f32 0.0, %v904
        %v906 = vpop.f32.mrf.mxu0
        %907 = vmatprep.mubr.f32.mxu0 0.0
        %908 = vmatmul.mubr.f32.gmra.mxu0 %v505
        %v909 = vpop.f32.mrf.mxu0
        %v910 = vadd.f32 0.0, %v909
        %v911 = vpop.f32.mrf.mxu0
        %912 = vdwg.mxu0
        %913 = vst.msk [vmem:[#allocation2 + $0x20] sm:$0xff] %vm482, %v905
        %914 = vst.msk [vmem:[#allocation2 + $0x28] sm:$0x3] %vm583, %v910
        %915 = vmatprep.subr.mxu0 0.0
        %916 = vmatpush1.msra.mxu0 0.0
        %917 = vmatprep.subr.mxu0 0.0
        %918 = vmatpush1.msra.mxu0 0.0
        %919 = vmatprep.subr.mxu0 0.0
        %920 = vmatpush1.msra.mxu0 0.0
        %921 = vmatprep.subr.mxu0 0.0
        %922 = vmatpush1.msra.mxu0 0.0
        %923 = vmatprep.subr.mxu0 0.0
        %924 = vmatpush1.msra.mxu0 0.0
        %925 = vmatprep.subr.mxu0 0.0
        %926 = vmatpush1.msra.mxu0 0.0
        %927 = vmatprep.subr.mxu0 0.0
        %928 = vmatpush1.msra.mxu0 0.0
        %929 = vmatprep.subr.mxu0 0.0
        %930 = vmatpush1.msra.mxu0 0.0
        %931 = vmatprep.subr.mxu0 0.0
        %932 = vmatpush1.msra.mxu0 0.0
        %933 = vmatprep.subr.mxu0 0.0
        %934 = vmatpush1.msra.mxu0 0.0
        %935 = vmatprep.subr.mxu0 0.0
        %936 = vmatpush1.msra.mxu0 0.0
        %937 = vmatprep.subr.mxu0 0.0
        %938 = vmatpush1.msra.mxu0 0.0
        %939 = vmatprep.subr.mxu0 0.0
        %940 = vmatpush1.msra.mxu0 0.0
        %941 = vmatprep.subr.mxu0 0.0
        %942 = vmatpush1.msra.mxu0 0.0
        %943 = vmatprep.subr.mxu0 0.0
        %944 = vmatpush1.msra.mxu0 %v837
        %945 = vmatprep.subr.mxu0 0.0
        %946 = vmatpush1.msra.mxu0 %v836
        %947 = vmatprep.subr.mxu0 0.0
        %948 = vmatpush2.msra.mxu0 0.0
        %949 = vmatprep.subr.mxu0 0.0
        %950 = vmatpush2.msra.mxu0 0.0
        %951 = vmatprep.subr.mxu0 0.0
        %952 = vmatpush2.msra.mxu0 0.0
        %953 = vmatprep.subr.mxu0 0.0
        %954 = vmatpush2.msra.mxu0 0.0
        %955 = vmatprep.subr.mxu0 0.0
        %956 = vmatpush2.msra.mxu0 0.0
        %957 = vmatprep.subr.mxu0 0.0
        %958 = vmatpush2.msra.mxu0 0.0
        %959 = vmatprep.subr.mxu0 0.0
        %960 = vmatpush2.msra.mxu0 0.0
        %961 = vmatprep.subr.mxu0 0.0
        %962 = vmatpush2.msra.mxu0 0.0
        %963 = vmatprep.subr.mxu0 0.0
        %964 = vmatpush2.msra.mxu0 0.0
        %965 = vmatprep.subr.mxu0 0.0
        %966 = vmatpush2.msra.mxu0 0.0
        %967 = vmatprep.subr.mxu0 0.0
        %968 = vmatpush2.msra.mxu0 0.0
        %969 = vmatprep.subr.mxu0 0.0
        %970 = vmatpush2.msra.mxu0 0.0
        %971 = vmatprep.subr.mxu0 0.0
        %972 = vmatpush2.msra.mxu0 0.0
        %973 = vmatprep.subr.mxu0 0.0
        %974 = vmatpush2.msra.mxu0 0.0
        %975 = vmatprep.subr.mxu0 0.0
        %976 = vmatpush2.msra.mxu0 0.0
        %977 = vmatprep.subr.mxu0 0.0
        %978 = vmatpush2.msra.mxu0 0.0
        %979 = vmatprep.mubr.f32.mxu0 0.0
        %980 = vmatmul.mubr.f32.gmra.mxu0 %v586
        %v981 = vpop.f32.mrf.mxu0
        %v982 = vadd.f32 0.0, %v981
        %v983 = vpop.f32.mrf.mxu0
        %984 = vmatprep.mubr.f32.mxu0 0.0
        %985 = vmatmul.mubr.f32.gmra.mxu0 %v589
        %v986 = vpop.f32.mrf.mxu0
        %v987 = vadd.f32 0.0, %v986
        %v988 = vpop.f32.mrf.mxu0
        %989 = vdwg.mxu0
        %990 = vst.msk [vmem:[#allocation3 + $0x20] sm:$0xff] %vm482, %v982
        %991 = vst.msk [vmem:[#allocation3 + $0x28] sm:$0xff] %vm482, %v987
        %s992 = scalar_lea.vmem %s425, 64 [#allocation12]
        %v993 = vld [vmem:[%s992] sm:$0xff]
        %v994 = vld [vmem:[%s992 + $0x8] sm:$0xff]
        %s995 = scalar_lea.vmem %s434, 64 [#allocation13]
        %v996 = vld [vmem:[%s995] sm:$0xff]
        %v997 = vld [vmem:[%s995 + $0x8] sm:$0xff]
        %v998 = vsub.f32 %v996, %v993
        %v999 = vsub.f32 %v997, %v994
        %1000 = vmatprep.subr.mxu0 0.0
        %1001 = vmatpush1.msra.mxu0 0.0
        %1002 = vmatprep.subr.mxu0 0.0
        %1003 = vmatpush1.msra.mxu0 0.0
        %1004 = vmatprep.subr.mxu0 0.0
        %1005 = vmatpush1.msra.mxu0 0.0
        %1006 = vmatprep.subr.mxu0 0.0
        %1007 = vmatpush1.msra.mxu0 0.0
        %1008 = vmatprep.subr.mxu0 0.0
        %1009 = vmatpush1.msra.mxu0 0.0
        %1010 = vmatprep.subr.mxu0 0.0
        %1011 = vmatpush1.msra.mxu0 0.0
        %1012 = vmatprep.subr.mxu0 0.0
        %1013 = vmatpush1.msra.mxu0 0.0
        %1014 = vmatprep.subr.mxu0 0.0
        %1015 = vmatpush1.msra.mxu0 0.0
        %1016 = vmatprep.subr.mxu0 0.0
        %1017 = vmatpush1.msra.mxu0 0.0
        %1018 = vmatprep.subr.mxu0 0.0
        %1019 = vmatpush1.msra.mxu0 0.0
        %1020 = vmatprep.subr.mxu0 0.0
        %1021 = vmatpush1.msra.mxu0 0.0
        %1022 = vmatprep.subr.mxu0 0.0
        %1023 = vmatpush1.msra.mxu0 0.0
        %1024 = vmatprep.subr.mxu0 0.0
        %1025 = vmatpush1.msra.mxu0 0.0
        %1026 = vmatprep.subr.mxu0 0.0
        %1027 = vmatpush1.msra.mxu0 0.0
        %1028 = vmatprep.subr.mxu0 0.0
        %1029 = vmatpush1.msra.mxu0 %v994
        %1030 = vmatprep.subr.mxu0 0.0
        %1031 = vmatpush1.msra.mxu0 %v993
        %1032 = vmatprep.subr.mxu0 0.0
        %1033 = vmatpush2.msra.mxu0 0.0
        %1034 = vmatprep.subr.mxu0 0.0
        %1035 = vmatpush2.msra.mxu0 0.0
        %1036 = vmatprep.subr.mxu0 0.0
        %1037 = vmatpush2.msra.mxu0 0.0
        %1038 = vmatprep.subr.mxu0 0.0
        %1039 = vmatpush2.msra.mxu0 0.0
        %1040 = vmatprep.subr.mxu0 0.0
        %1041 = vmatpush2.msra.mxu0 0.0
        %1042 = vmatprep.subr.mxu0 0.0
        %1043 = vmatpush2.msra.mxu0 0.0
        %1044 = vmatprep.subr.mxu0 0.0
        %1045 = vmatpush2.msra.mxu0 0.0
        %1046 = vmatprep.subr.mxu0 0.0
        %1047 = vmatpush2.msra.mxu0 0.0
        %1048 = vmatprep.subr.mxu0 0.0
        %1049 = vmatpush2.msra.mxu0 0.0
        %1050 = vmatprep.subr.mxu0 0.0
        %1051 = vmatpush2.msra.mxu0 0.0
        %1052 = vmatprep.subr.mxu0 0.0
        %1053 = vmatpush2.msra.mxu0 0.0
        %1054 = vmatprep.subr.mxu0 0.0
        %1055 = vmatpush2.msra.mxu0 0.0
        %1056 = vmatprep.subr.mxu0 0.0
        %1057 = vmatpush2.msra.mxu0 0.0
        %1058 = vmatprep.subr.mxu0 0.0
        %1059 = vmatpush2.msra.mxu0 0.0
        %1060 = vmatprep.subr.mxu0 0.0
        %1061 = vmatpush2.msra.mxu0 0.0
        %1062 = vmatprep.subr.mxu0 0.0
        %1063 = vmatpush2.msra.mxu0 0.0
        %1064 = vmatprep.mubr.f32.mxu0 0.0
        %1065 = vmatmul.mubr.f32.gmra.mxu0 %v502
        %v1066 = vpop.f32.mrf.mxu0
        %v1067 = vadd.f32 0.0, %v1066
        %v1068 = vpop.f32.mrf.mxu0
        %1069 = vmatprep.mubr.f32.mxu0 0.0
        %1070 = vmatmul.mubr.f32.gmra.mxu0 %v505
        %v1071 = vpop.f32.mrf.mxu0
        %v1072 = vadd.f32 0.0, %v1071
        %v1073 = vpop.f32.mrf.mxu0
        %1074 = vdwg.mxu0
        %1075 = vst.msk [vmem:[#allocation2 + $0x30] sm:$0xff] %vm482, %v1067
        %1076 = vst.msk [vmem:[#allocation2 + $0x38] sm:$0x3] %vm583, %v1072
        %1077 = vmatprep.subr.mxu0 0.0
        %1078 = vmatpush1.msra.mxu0 0.0
        %1079 = vmatprep.subr.mxu0 0.0
        %1080 = vmatpush1.msra.mxu0 0.0
        %1081 = vmatprep.subr.mxu0 0.0
        %1082 = vmatpush1.msra.mxu0 0.0
        %1083 = vmatprep.subr.mxu0 0.0
        %1084 = vmatpush1.msra.mxu0 0.0
        %1085 = vmatprep.subr.mxu0 0.0
        %1086 = vmatpush1.msra.mxu0 0.0
        %1087 = vmatprep.subr.mxu0 0.0
        %1088 = vmatpush1.msra.mxu0 0.0
        %1089 = vmatprep.subr.mxu0 0.0
        %1090 = vmatpush1.msra.mxu0 0.0
        %1091 = vmatprep.subr.mxu0 0.0
        %1092 = vmatpush1.msra.mxu0 0.0
        %1093 = vmatprep.subr.mxu0 0.0
        %1094 = vmatpush1.msra.mxu0 0.0
        %1095 = vmatprep.subr.mxu0 0.0
        %1096 = vmatpush1.msra.mxu0 0.0
        %1097 = vmatprep.subr.mxu0 0.0
        %1098 = vmatpush1.msra.mxu0 0.0
        %1099 = vmatprep.subr.mxu0 0.0
        %1100 = vmatpush1.msra.mxu0 0.0
        %1101 = vmatprep.subr.mxu0 0.0
        %1102 = vmatpush1.msra.mxu0 0.0
        %1103 = vmatprep.subr.mxu0 0.0
        %1104 = vmatpush1.msra.mxu0 0.0
        %1105 = vmatprep.subr.mxu0 0.0
        %1106 = vmatpush1.msra.mxu0 %v999
        %1107 = vmatprep.subr.mxu0 0.0
        %1108 = vmatpush1.msra.mxu0 %v998
        %1109 = vmatprep.subr.mxu0 0.0
        %1110 = vmatpush2.msra.mxu0 0.0
        %1111 = vmatprep.subr.mxu0 0.0
        %1112 = vmatpush2.msra.mxu0 0.0
        %1113 = vmatprep.subr.mxu0 0.0
        %1114 = vmatpush2.msra.mxu0 0.0
        %1115 = vmatprep.subr.mxu0 0.0
        %1116 = vmatpush2.msra.mxu0 0.0
        %1117 = vmatprep.subr.mxu0 0.0
        %1118 = vmatpush2.msra.mxu0 0.0
        %1119 = vmatprep.subr.mxu0 0.0
        %1120 = vmatpush2.msra.mxu0 0.0
        %1121 = vmatprep.subr.mxu0 0.0
        %1122 = vmatpush2.msra.mxu0 0.0
        %1123 = vmatprep.subr.mxu0 0.0
        %1124 = vmatpush2.msra.mxu0 0.0
        %1125 = vmatprep.subr.mxu0 0.0
        %1126 = vmatpush2.msra.mxu0 0.0
        %1127 = vmatprep.subr.mxu0 0.0
        %1128 = vmatpush2.msra.mxu0 0.0
        %1129 = vmatprep.subr.mxu0 0.0
        %1130 = vmatpush2.msra.mxu0 0.0
        %1131 = vmatprep.subr.mxu0 0.0
        %1132 = vmatpush2.msra.mxu0 0.0
        %1133 = vmatprep.subr.mxu0 0.0
        %1134 = vmatpush2.msra.mxu0 0.0
        %1135 = vmatprep.subr.mxu0 0.0
        %1136 = vmatpush2.msra.mxu0 0.0
        %1137 = vmatprep.subr.mxu0 0.0
        %1138 = vmatpush2.msra.mxu0 0.0
        %1139 = vmatprep.subr.mxu0 0.0
        %1140 = vmatpush2.msra.mxu0 0.0
        %1141 = vmatprep.mubr.f32.mxu0 0.0
        %1142 = vmatmul.mubr.f32.gmra.mxu0 %v586
        %v1143 = vpop.f32.mrf.mxu0
        %v1144 = vadd.f32 0.0, %v1143
        %v1145 = vpop.f32.mrf.mxu0
        %1146 = vmatprep.mubr.f32.mxu0 0.0
        %1147 = vmatmul.mubr.f32.gmra.mxu0 %v589
        %v1148 = vpop.f32.mrf.mxu0
        %v1149 = vadd.f32 0.0, %v1148
        %v1150 = vpop.f32.mrf.mxu0
        %1151 = vdwg.mxu0
        %1152 = vst.msk [vmem:[#allocation3 + $0x30] sm:$0xff] %vm482, %v1144
        %1153 = vst.msk [vmem:[#allocation3 + $0x38] sm:$0xff] %vm482, %v1149
        %s1154 = scalar_lea.vmem %s425, 32 [#allocation12]
        %v1155 = vld [vmem:[%s1154] sm:$0xff]
        %v1156 = vld [vmem:[%s1154 + $0x8] sm:$0xff]
        %s1157 = scalar_lea.vmem %s434, 32 [#allocation13]
        %v1158 = vld [vmem:[%s1157] sm:$0xff]
        %v1159 = vld [vmem:[%s1157 + $0x8] sm:$0xff]
        %v1160 = vsub.f32 %v1158, %v1155
        %v1161 = vsub.f32 %v1159, %v1156
        %1162 = vmatprep.subr.mxu0 0.0
        %1163 = vmatpush1.msra.mxu0 0.0
        %1164 = vmatprep.subr.mxu0 0.0
        %1165 = vmatpush1.msra.mxu0 0.0
        %1166 = vmatprep.subr.mxu0 0.0
        %1167 = vmatpush1.msra.mxu0 0.0
        %1168 = vmatprep.subr.mxu0 0.0
        %1169 = vmatpush1.msra.mxu0 0.0
        %1170 = vmatprep.subr.mxu0 0.0
        %1171 = vmatpush1.msra.mxu0 0.0
        %1172 = vmatprep.subr.mxu0 0.0
        %1173 = vmatpush1.msra.mxu0 0.0
        %1174 = vmatprep.subr.mxu0 0.0
        %1175 = vmatpush1.msra.mxu0 0.0
        %1176 = vmatprep.subr.mxu0 0.0
        %1177 = vmatpush1.msra.mxu0 0.0
        %1178 = vmatprep.subr.mxu0 0.0
        %1179 = vmatpush1.msra.mxu0 0.0
        %1180 = vmatprep.subr.mxu0 0.0
        %1181 = vmatpush1.msra.mxu0 0.0
        %1182 = vmatprep.subr.mxu0 0.0
        %1183 = vmatpush1.msra.mxu0 0.0
        %1184 = vmatprep.subr.mxu0 0.0
        %1185 = vmatpush1.msra.mxu0 0.0
        %1186 = vmatprep.subr.mxu0 0.0
        %1187 = vmatpush1.msra.mxu0 0.0
        %1188 = vmatprep.subr.mxu0 0.0
        %1189 = vmatpush1.msra.mxu0 0.0
        %1190 = vmatprep.subr.mxu0 0.0
        %1191 = vmatpush1.msra.mxu0 %v1156
        %1192 = vmatprep.subr.mxu0 0.0
        %1193 = vmatpush1.msra.mxu0 %v1155
        %1194 = vmatprep.subr.mxu0 0.0
        %1195 = vmatpush2.msra.mxu0 0.0
        %1196 = vmatprep.subr.mxu0 0.0
        %1197 = vmatpush2.msra.mxu0 0.0
        %1198 = vmatprep.subr.mxu0 0.0
        %1199 = vmatpush2.msra.mxu0 0.0
        %1200 = vmatprep.subr.mxu0 0.0
        %1201 = vmatpush2.msra.mxu0 0.0
        %1202 = vmatprep.subr.mxu0 0.0
        %1203 = vmatpush2.msra.mxu0 0.0
        %1204 = vmatprep.subr.mxu0 0.0
        %1205 = vmatpush2.msra.mxu0 0.0
        %1206 = vmatprep.subr.mxu0 0.0
        %1207 = vmatpush2.msra.mxu0 0.0
        %1208 = vmatprep.subr.mxu0 0.0
        %1209 = vmatpush2.msra.mxu0 0.0
        %1210 = vmatprep.subr.mxu0 0.0
        %1211 = vmatpush2.msra.mxu0 0.0
        %1212 = vmatprep.subr.mxu0 0.0
        %1213 = vmatpush2.msra.mxu0 0.0
        %1214 = vmatprep.subr.mxu0 0.0
        %1215 = vmatpush2.msra.mxu0 0.0
        %1216 = vmatprep.subr.mxu0 0.0
        %1217 = vmatpush2.msra.mxu0 0.0
        %1218 = vmatprep.subr.mxu0 0.0
        %1219 = vmatpush2.msra.mxu0 0.0
        %1220 = vmatprep.subr.mxu0 0.0
        %1221 = vmatpush2.msra.mxu0 0.0
        %1222 = vmatprep.subr.mxu0 0.0
        %1223 = vmatpush2.msra.mxu0 0.0
        %1224 = vmatprep.subr.mxu0 0.0
        %1225 = vmatpush2.msra.mxu0 0.0
        %1226 = vmatprep.mubr.f32.mxu0 0.0
        %1227 = vmatmul.mubr.f32.gmra.mxu0 %v502
        %v1228 = vpop.f32.mrf.mxu0
        %v1229 = vadd.f32 0.0, %v1228
        %v1230 = vpop.f32.mrf.mxu0
        %1231 = vmatprep.mubr.f32.mxu0 0.0
        %1232 = vmatmul.mubr.f32.gmra.mxu0 %v505
        %v1233 = vpop.f32.mrf.mxu0
        %v1234 = vadd.f32 0.0, %v1233
        %v1235 = vpop.f32.mrf.mxu0
        %1236 = vdwg.mxu0
        %1237 = vst.msk [vmem:[#allocation2 + $0x40] sm:$0xff] %vm482, %v1229
        %1238 = vst.msk [vmem:[#allocation2 + $0x48] sm:$0x3] %vm583, %v1234
        %1239 = vmatprep.subr.mxu0 0.0
        %1240 = vmatpush1.msra.mxu0 0.0
        %1241 = vmatprep.subr.mxu0 0.0
        %1242 = vmatpush1.msra.mxu0 0.0
        %1243 = vmatprep.subr.mxu0 0.0
        %1244 = vmatpush1.msra.mxu0 0.0
        %1245 = vmatprep.subr.mxu0 0.0
        %1246 = vmatpush1.msra.mxu0 0.0
        %1247 = vmatprep.subr.mxu0 0.0
        %1248 = vmatpush1.msra.mxu0 0.0
        %1249 = vmatprep.subr.mxu0 0.0
        %1250 = vmatpush1.msra.mxu0 0.0
        %1251 = vmatprep.subr.mxu0 0.0
        %1252 = vmatpush1.msra.mxu0 0.0
        %1253 = vmatprep.subr.mxu0 0.0
        %1254 = vmatpush1.msra.mxu0 0.0
        %1255 = vmatprep.subr.mxu0 0.0
        %1256 = vmatpush1.msra.mxu0 0.0
        %1257 = vmatprep.subr.mxu0 0.0
        %1258 = vmatpush1.msra.mxu0 0.0
        %1259 = vmatprep.subr.mxu0 0.0
        %1260 = vmatpush1.msra.mxu0 0.0
        %1261 = vmatprep.subr.mxu0 0.0
        %1262 = vmatpush1.msra.mxu0 0.0
        %1263 = vmatprep.subr.mxu0 0.0
        %1264 = vmatpush1.msra.mxu0 0.0
        %1265 = vmatprep.subr.mxu0 0.0
        %1266 = vmatpush1.msra.mxu0 0.0
        %1267 = vmatprep.subr.mxu0 0.0
        %1268 = vmatpush1.msra.mxu0 %v1161
        %1269 = vmatprep.subr.mxu0 0.0
        %1270 = vmatpush1.msra.mxu0 %v1160
        %1271 = vmatprep.subr.mxu0 0.0
        %1272 = vmatpush2.msra.mxu0 0.0
        %1273 = vmatprep.subr.mxu0 0.0
        %1274 = vmatpush2.msra.mxu0 0.0
        %1275 = vmatprep.subr.mxu0 0.0
        %1276 = vmatpush2.msra.mxu0 0.0
        %1277 = vmatprep.subr.mxu0 0.0
        %1278 = vmatpush2.msra.mxu0 0.0
        %1279 = vmatprep.subr.mxu0 0.0
        %1280 = vmatpush2.msra.mxu0 0.0
        %1281 = vmatprep.subr.mxu0 0.0
        %1282 = vmatpush2.msra.mxu0 0.0
        %1283 = vmatprep.subr.mxu0 0.0
        %1284 = vmatpush2.msra.mxu0 0.0
        %1285 = vmatprep.subr.mxu0 0.0
        %1286 = vmatpush2.msra.mxu0 0.0
        %1287 = vmatprep.subr.mxu0 0.0
        %1288 = vmatpush2.msra.mxu0 0.0
        %1289 = vmatprep.subr.mxu0 0.0
        %1290 = vmatpush2.msra.mxu0 0.0
        %1291 = vmatprep.subr.mxu0 0.0
        %1292 = vmatpush2.msra.mxu0 0.0
        %1293 = vmatprep.subr.mxu0 0.0
        %1294 = vmatpush2.msra.mxu0 0.0
        %1295 = vmatprep.subr.mxu0 0.0
        %1296 = vmatpush2.msra.mxu0 0.0
        %1297 = vmatprep.subr.mxu0 0.0
        %1298 = vmatpush2.msra.mxu0 0.0
        %1299 = vmatprep.subr.mxu0 0.0
        %1300 = vmatpush2.msra.mxu0 0.0
        %1301 = vmatprep.subr.mxu0 0.0
        %1302 = vmatpush2.msra.mxu0 0.0
        %1303 = vmatprep.mubr.f32.mxu0 0.0
        %1304 = vmatmul.mubr.f32.gmra.mxu0 %v586
        %v1305 = vpop.f32.mrf.mxu0
        %v1306 = vadd.f32 0.0, %v1305
        %v1307 = vpop.f32.mrf.mxu0
        %1308 = vmatprep.mubr.f32.mxu0 0.0
        %1309 = vmatmul.mubr.f32.gmra.mxu0 %v589
        %v1310 = vpop.f32.mrf.mxu0
        %v1311 = vadd.f32 0.0, %v1310
        %v1312 = vpop.f32.mrf.mxu0
        %1313 = vdwg.mxu0
        %1314 = vst.msk [vmem:[#allocation3 + $0x40] sm:$0xff] %vm482, %v1306
        %1315 = vst.msk [vmem:[#allocation3 + $0x48] sm:$0xff] %vm482, %v1311
        %s1316 = scalar_lea.vmem %s425, 80 [#allocation12]
        %v1317 = vld [vmem:[%s1316] sm:$0xff]
        %v1318 = vld [vmem:[%s1316 + $0x8] sm:$0xff]
        %s1319 = scalar_lea.vmem %s434, 80 [#allocation13]
        %v1320 = vld [vmem:[%s1319] sm:$0xff]
        %v1321 = vld [vmem:[%s1319 + $0x8] sm:$0xff]
        %v1322 = vsub.f32 %v1320, %v1317
        %v1323 = vsub.f32 %v1321, %v1318
        %1324 = vmatprep.subr.mxu0 0.0
        %1325 = vmatpush1.msra.mxu0 0.0
        %1326 = vmatprep.subr.mxu0 0.0
        %1327 = vmatpush1.msra.mxu0 0.0
        %1328 = vmatprep.subr.mxu0 0.0
        %1329 = vmatpush1.msra.mxu0 0.0
        %1330 = vmatprep.subr.mxu0 0.0
        %1331 = vmatpush1.msra.mxu0 0.0
        %1332 = vmatprep.subr.mxu0 0.0
        %1333 = vmatpush1.msra.mxu0 0.0
        %1334 = vmatprep.subr.mxu0 0.0
        %1335 = vmatpush1.msra.mxu0 0.0
        %1336 = vmatprep.subr.mxu0 0.0
        %1337 = vmatpush1.msra.mxu0 0.0
        %1338 = vmatprep.subr.mxu0 0.0
        %1339 = vmatpush1.msra.mxu0 0.0
        %1340 = vmatprep.subr.mxu0 0.0
        %1341 = vmatpush1.msra.mxu0 0.0
        %1342 = vmatprep.subr.mxu0 0.0
        %1343 = vmatpush1.msra.mxu0 0.0
        %1344 = vmatprep.subr.mxu0 0.0
        %1345 = vmatpush1.msra.mxu0 0.0
        %1346 = vmatprep.subr.mxu0 0.0
        %1347 = vmatpush1.msra.mxu0 0.0
        %1348 = vmatprep.subr.mxu0 0.0
        %1349 = vmatpush1.msra.mxu0 0.0
        %1350 = vmatprep.subr.mxu0 0.0
        %1351 = vmatpush1.msra.mxu0 0.0
        %1352 = vmatprep.subr.mxu0 0.0
        %1353 = vmatpush1.msra.mxu0 %v1318
        %1354 = vmatprep.subr.mxu0 0.0
        %1355 = vmatpush1.msra.mxu0 %v1317
        %1356 = vmatprep.subr.mxu0 0.0
        %1357 = vmatpush2.msra.mxu0 0.0
        %1358 = vmatprep.subr.mxu0 0.0
        %1359 = vmatpush2.msra.mxu0 0.0
        %1360 = vmatprep.subr.mxu0 0.0
        %1361 = vmatpush2.msra.mxu0 0.0
        %1362 = vmatprep.subr.mxu0 0.0
        %1363 = vmatpush2.msra.mxu0 0.0
        %1364 = vmatprep.subr.mxu0 0.0
        %1365 = vmatpush2.msra.mxu0 0.0
        %1366 = vmatprep.subr.mxu0 0.0
        %1367 = vmatpush2.msra.mxu0 0.0
        %1368 = vmatprep.subr.mxu0 0.0
        %1369 = vmatpush2.msra.mxu0 0.0
        %1370 = vmatprep.subr.mxu0 0.0
        %1371 = vmatpush2.msra.mxu0 0.0
        %1372 = vmatprep.subr.mxu0 0.0
        %1373 = vmatpush2.msra.mxu0 0.0
        %1374 = vmatprep.subr.mxu0 0.0
        %1375 = vmatpush2.msra.mxu0 0.0
        %1376 = vmatprep.subr.mxu0 0.0
        %1377 = vmatpush2.msra.mxu0 0.0
        %1378 = vmatprep.subr.mxu0 0.0
        %1379 = vmatpush2.msra.mxu0 0.0
        %1380 = vmatprep.subr.mxu0 0.0
        %1381 = vmatpush2.msra.mxu0 0.0
        %1382 = vmatprep.subr.mxu0 0.0
        %1383 = vmatpush2.msra.mxu0 0.0
        %1384 = vmatprep.subr.mxu0 0.0
        %1385 = vmatpush2.msra.mxu0 0.0
        %1386 = vmatprep.subr.mxu0 0.0
        %1387 = vmatpush2.msra.mxu0 0.0
        %1388 = vmatprep.mubr.f32.mxu0 0.0
        %1389 = vmatmul.mubr.f32.gmra.mxu0 %v502
        %v1390 = vpop.f32.mrf.mxu0
        %v1391 = vadd.f32 0.0, %v1390
        %v1392 = vpop.f32.mrf.mxu0
        %1393 = vmatprep.mubr.f32.mxu0 0.0
        %1394 = vmatmul.mubr.f32.gmra.mxu0 %v505
        %v1395 = vpop.f32.mrf.mxu0
        %v1396 = vadd.f32 0.0, %v1395
        %v1397 = vpop.f32.mrf.mxu0
        %1398 = vdwg.mxu0
        %1399 = vst.msk [vmem:[#allocation2 + $0x50] sm:$0xff] %vm482, %v1391
        %1400 = vst.msk [vmem:[#allocation2 + $0x58] sm:$0x3] %vm583, %v1396
        %1401 = vmatprep.subr.mxu0 0.0
        %1402 = vmatpush1.msra.mxu0 0.0
        %1403 = vmatprep.subr.mxu0 0.0
        %1404 = vmatpush1.msra.mxu0 0.0
        %1405 = vmatprep.subr.mxu0 0.0
        %1406 = vmatpush1.msra.mxu0 0.0
        %1407 = vmatprep.subr.mxu0 0.0
        %1408 = vmatpush1.msra.mxu0 0.0
        %1409 = vmatprep.subr.mxu0 0.0
        %1410 = vmatpush1.msra.mxu0 0.0
        %1411 = vmatprep.subr.mxu0 0.0
        %1412 = vmatpush1.msra.mxu0 0.0
        %1413 = vmatprep.subr.mxu0 0.0
        %1414 = vmatpush1.msra.mxu0 0.0
        %1415 = vmatprep.subr.mxu0 0.0
        %1416 = vmatpush1.msra.mxu0 0.0
        %1417 = vmatprep.subr.mxu0 0.0
        %1418 = vmatpush1.msra.mxu0 0.0
        %1419 = vmatprep.subr.mxu0 0.0
        %1420 = vmatpush1.msra.mxu0 0.0
        %1421 = vmatprep.subr.mxu0 0.0
        %1422 = vmatpush1.msra.mxu0 0.0
        %1423 = vmatprep.subr.mxu0 0.0
        %1424 = vmatpush1.msra.mxu0 0.0
        %1425 = vmatprep.subr.mxu0 0.0
        %1426 = vmatpush1.msra.mxu0 0.0
        %1427 = vmatprep.subr.mxu0 0.0
        %1428 = vmatpush1.msra.mxu0 0.0
        %1429 = vmatprep.subr.mxu0 0.0
        %1430 = vmatpush1.msra.mxu0 %v1323
        %1431 = vmatprep.subr.mxu0 0.0
        %1432 = vmatpush1.msra.mxu0 %v1322
        %1433 = vmatprep.subr.mxu0 0.0
        %1434 = vmatpush2.msra.mxu0 0.0
        %1435 = vmatprep.subr.mxu0 0.0
        %1436 = vmatpush2.msra.mxu0 0.0
        %1437 = vmatprep.subr.mxu0 0.0
        %1438 = vmatpush2.msra.mxu0 0.0
        %1439 = vmatprep.subr.mxu0 0.0
        %1440 = vmatpush2.msra.mxu0 0.0
        %1441 = vmatprep.subr.mxu0 0.0
        %1442 = vmatpush2.msra.mxu0 0.0
        %1443 = vmatprep.subr.mxu0 0.0
        %1444 = vmatpush2.msra.mxu0 0.0
        %1445 = vmatprep.subr.mxu0 0.0
        %1446 = vmatpush2.msra.mxu0 0.0
        %1447 = vmatprep.subr.mxu0 0.0
        %1448 = vmatpush2.msra.mxu0 0.0
        %1449 = vmatprep.subr.mxu0 0.0
        %1450 = vmatpush2.msra.mxu0 0.0
        %1451 = vmatprep.subr.mxu0 0.0
        %1452 = vmatpush2.msra.mxu0 0.0
        %1453 = vmatprep.subr.mxu0 0.0
        %1454 = vmatpush2.msra.mxu0 0.0
        %1455 = vmatprep.subr.mxu0 0.0
        %1456 = vmatpush2.msra.mxu0 0.0
        %1457 = vmatprep.subr.mxu0 0.0
        %1458 = vmatpush2.msra.mxu0 0.0
        %1459 = vmatprep.subr.mxu0 0.0
        %1460 = vmatpush2.msra.mxu0 0.0
        %1461 = vmatprep.subr.mxu0 0.0
        %1462 = vmatpush2.msra.mxu0 0.0
        %1463 = vmatprep.subr.mxu0 0.0
        %1464 = vmatpush2.msra.mxu0 0.0
        %1465 = vmatprep.mubr.f32.mxu0 0.0
        %1466 = vmatmul.mubr.f32.gmra.mxu0 %v586
        %v1467 = vpop.f32.mrf.mxu0
        %v1468 = vadd.f32 0.0, %v1467
        %v1469 = vpop.f32.mrf.mxu0
        %1470 = vmatprep.mubr.f32.mxu0 0.0
        %1471 = vmatmul.mubr.f32.gmra.mxu0 %v589
        %v1472 = vpop.f32.mrf.mxu0
        %v1473 = vadd.f32 0.0, %v1472
        %v1474 = vpop.f32.mrf.mxu0
        %1475 = vdwg.mxu0
        %1476 = vst.msk [vmem:[#allocation3 + $0x50] sm:$0xff] %vm482, %v1468
        %1477 = vst.msk [vmem:[#allocation3 + $0x58] sm:$0xff] %vm482, %v1473
        %v1478 = vld [vmem:[#allocation2] sm:$0xff]
        %v1479 = vld [vmem:[#allocation2 + $0x8] sm:$0xff]
        %v1480 = vld [vmem:[#allocation2 + $0x10] sm:$0xff]
        %v1481 = vld [vmem:[#allocation2 + $0x18] sm:$0xff]
        %v1482 = vld [vmem:[#allocation2 + $0x20] sm:$0xff]
        %v1483 = vld [vmem:[#allocation2 + $0x28] sm:$0xff]
        %v1484 = vld [vmem:[#allocation2 + $0x30] sm:$0xff]
        %v1485 = vld [vmem:[#allocation2 + $0x38] sm:$0xff]
        %v1486 = vld [vmem:[#allocation2 + $0x40] sm:$0xff]
        %v1487 = vld [vmem:[#allocation2 + $0x48] sm:$0xff]
        %v1488 = vld [vmem:[#allocation2 + $0x50] sm:$0xff]
        %v1489 = vld [vmem:[#allocation2 + $0x58] sm:$0xff]
        %v1490 = vld [vmem:[#allocation7] sm:$0xff]
        %v1491 = vld [vmem:[#allocation7 + $0x8] sm:$0xff]
        %v1493 = vsel %vm482, %v1478, 0
        %v1496 = vsel %vm482, %v1479, 0
        %v1499 = vsel %vm482, %v1480, 0
        %v1502 = vsel %vm482, %v1481, 0
        %v1505 = vsel %vm482, %v1482, 0
        %v1508 = vsel %vm482, %v1483, 0
        %v1511 = vsel %vm482, %v1484, 0
        %v1514 = vsel %vm482, %v1485, 0
        %v1517 = vsel %vm482, %v1486, 0
        %v1520 = vsel %vm482, %v1487, 0
        %v1523 = vsel %vm482, %v1488, 0
        %v1526 = vsel %vm482, %v1489, 0
        %1528 = vmatprep.subr.mxu0 0.0
        %1529 = vmatpush1.msra.mxu0 0.0
        %1530 = vmatprep.subr.mxu0 0.0
        %1531 = vmatpush1.msra.mxu0 0.0
        %1532 = vmatprep.subr.mxu0 0.0
        %1533 = vmatpush1.msra.mxu0 0.0
        %1534 = vmatprep.subr.mxu0 0.0
        %1535 = vmatpush1.msra.mxu0 0.0
        %1536 = vmatprep.subr.mxu0 0.0
        %1537 = vmatpush1.msra.mxu0 0.0
        %1538 = vmatprep.subr.mxu0 0.0
        %1539 = vmatpush1.msra.mxu0 0.0
        %1540 = vmatprep.subr.mxu0 0.0
        %1541 = vmatpush1.msra.mxu0 0.0
        %1542 = vmatprep.subr.mxu0 0.0
        %1543 = vmatpush1.msra.mxu0 0.0
        %1544 = vmatprep.subr.mxu0 0.0
        %1545 = vmatpush1.msra.mxu0 0.0
        %1546 = vmatprep.subr.mxu0 0.0
        %1547 = vmatpush1.msra.mxu0 0.0
        %1548 = vmatprep.subr.mxu0 0.0
        %1549 = vmatpush1.msra.mxu0 0.0
        %1550 = vmatprep.subr.mxu0 0.0
        %1551 = vmatpush1.msra.mxu0 0.0
        %1552 = vmatprep.subr.mxu0 0.0
        %1553 = vmatpush1.msra.mxu0 0.0
        %1554 = vmatprep.subr.mxu0 0.0
        %1555 = vmatpush1.msra.mxu0 0.0
        %1556 = vmatprep.subr.mxu0 0.0
        %1557 = vmatpush1.msra.mxu0 %v1491
        %1558 = vmatprep.subr.mxu0 0.0
        %1559 = vmatpush1.msra.mxu0 %v1490
        %1560 = vmatprep.subr.mxu0 0.0
        %1561 = vmatpush2.msra.mxu0 0.0
        %1562 = vmatprep.subr.mxu0 0.0
        %1563 = vmatpush2.msra.mxu0 0.0
        %1564 = vmatprep.subr.mxu0 0.0
        %1565 = vmatpush2.msra.mxu0 0.0
        %1566 = vmatprep.subr.mxu0 0.0
        %1567 = vmatpush2.msra.mxu0 0.0
        %1568 = vmatprep.subr.mxu0 0.0
        %1569 = vmatpush2.msra.mxu0 0.0
        %1570 = vmatprep.subr.mxu0 0.0
        %1571 = vmatpush2.msra.mxu0 0.0
        %1572 = vmatprep.subr.mxu0 0.0
        %1573 = vmatpush2.msra.mxu0 0.0
        %1574 = vmatprep.subr.mxu0 0.0
        %1575 = vmatpush2.msra.mxu0 0.0
        %1576 = vmatprep.subr.mxu0 0.0
        %1577 = vmatpush2.msra.mxu0 0.0
        %1578 = vmatprep.subr.mxu0 0.0
        %1579 = vmatpush2.msra.mxu0 0.0
        %1580 = vmatprep.subr.mxu0 0.0
        %1581 = vmatpush2.msra.mxu0 0.0
        %1582 = vmatprep.subr.mxu0 0.0
        %1583 = vmatpush2.msra.mxu0 0.0
        %1584 = vmatprep.subr.mxu0 0.0
        %1585 = vmatpush2.msra.mxu0 0.0
        %1586 = vmatprep.subr.mxu0 0.0
        %1587 = vmatpush2.msra.mxu0 0.0
        %1588 = vmatprep.subr.mxu0 0.0
        %1589 = vmatpush2.msra.mxu0 0.0
        %1590 = vmatprep.subr.mxu0 0.0
        %1591 = vmatpush2.msra.mxu0 0.0
        %1592 = vmatprep.mubr.f32.mxu0 0.0
        %1593 = vmatmul.mubr.f32.gmra.mxu0 %v1493
        %v1594 = vpop.f32.mrf.mxu0
        %v1595 = vadd.f32 0.0, %v1594
        %v1596 = vpop.f32.mrf.mxu0
        %1597 = vmatprep.mubr.f32.mxu0 0.0
        %1598 = vmatmul.mubr.f32.gmra.mxu0 %v1496
        %v1599 = vpop.f32.mrf.mxu0
        %v1600 = vadd.f32 0.0, %v1599
        %v1601 = vpop.f32.mrf.mxu0
        %1602 = vmatprep.mubr.f32.mxu0 0.0
        %1603 = vmatmul.mubr.f32.gmra.mxu0 %v1499
        %v1604 = vpop.f32.mrf.mxu0
        %v1605 = vadd.f32 0.0, %v1604
        %v1606 = vpop.f32.mrf.mxu0
        %1607 = vmatprep.mubr.f32.mxu0 0.0
        %1608 = vmatmul.mubr.f32.gmra.mxu0 %v1502
        %v1609 = vpop.f32.mrf.mxu0
        %v1610 = vadd.f32 0.0, %v1609
        %v1611 = vpop.f32.mrf.mxu0
        %1612 = vmatprep.mubr.f32.mxu0 0.0
        %1613 = vmatmul.mubr.f32.gmra.mxu0 %v1505
        %v1614 = vpop.f32.mrf.mxu0
        %v1615 = vadd.f32 0.0, %v1614
        %v1616 = vpop.f32.mrf.mxu0
        %1617 = vmatprep.mubr.f32.mxu0 0.0
        %1618 = vmatmul.mubr.f32.gmra.mxu0 %v1508
        %v1619 = vpop.f32.mrf.mxu0
        %v1620 = vadd.f32 0.0, %v1619
        %v1621 = vpop.f32.mrf.mxu0
        %1622 = vmatprep.mubr.f32.mxu0 0.0
        %1623 = vmatmul.mubr.f32.gmra.mxu0 %v1511
        %v1624 = vpop.f32.mrf.mxu0
        %v1625 = vadd.f32 0.0, %v1624
        %v1626 = vpop.f32.mrf.mxu0
        %1627 = vmatprep.mubr.f32.mxu0 0.0
        %1628 = vmatmul.mubr.f32.gmra.mxu0 %v1514
        %v1629 = vpop.f32.mrf.mxu0
        %v1630 = vadd.f32 0.0, %v1629
        %v1631 = vpop.f32.mrf.mxu0
        %1632 = vmatprep.mubr.f32.mxu0 0.0
        %1633 = vmatmul.mubr.f32.gmra.mxu0 %v1517
        %v1634 = vpop.f32.mrf.mxu0
        %v1635 = vadd.f32 0.0, %v1634
        %v1636 = vpop.f32.mrf.mxu0
        %1637 = vmatprep.mubr.f32.mxu0 0.0
        %1638 = vmatmul.mubr.f32.gmra.mxu0 %v1520
        %v1639 = vpop.f32.mrf.mxu0
        %v1640 = vadd.f32 0.0, %v1639
        %v1641 = vpop.f32.mrf.mxu0
        %1642 = vmatprep.mubr.f32.mxu0 0.0
        %1643 = vmatmul.mubr.f32.gmra.mxu0 %v1523
        %v1644 = vpop.f32.mrf.mxu0
        %v1645 = vadd.f32 0.0, %v1644
        %v1646 = vpop.f32.mrf.mxu0
        %1647 = vmatprep.mubr.f32.mxu0 0.0
        %1648 = vmatmul.mubr.f32.gmra.mxu0 %v1526
        %v1649 = vpop.f32.mrf.mxu0
        %v1650 = vadd.f32 0.0, %v1649
        %v1651 = vpop.f32.mrf.mxu0
        %1652 = vdwg.mxu0
        %v1653 = vld [vmem:[#allocation3] sm:$0xff]
        %v1654 = vld [vmem:[#allocation3 + $0x8] sm:$0xff]
        %v1655 = vld [vmem:[#allocation3 + $0x10] sm:$0xff]
        %v1656 = vld [vmem:[#allocation3 + $0x18] sm:$0xff]
        %v1657 = vld [vmem:[#allocation3 + $0x20] sm:$0xff]
        %v1658 = vld [vmem:[#allocation3 + $0x28] sm:$0xff]
        %v1659 = vld [vmem:[#allocation3 + $0x30] sm:$0xff]
        %v1660 = vld [vmem:[#allocation3 + $0x38] sm:$0xff]
        %v1661 = vld [vmem:[#allocation3 + $0x40] sm:$0xff]
        %v1662 = vld [vmem:[#allocation3 + $0x48] sm:$0xff]
        %v1663 = vld [vmem:[#allocation3 + $0x50] sm:$0xff]
        %v1664 = vld [vmem:[#allocation3 + $0x58] sm:$0xff]
        %v1665 = vld [vmem:[#allocation10] sm:$0xff]
        %v1666 = vld [vmem:[#allocation10 + $0x8] sm:$0xff]
        %v1668 = vsel %vm482, %v1653, 0
        %v1671 = vsel %vm482, %v1654, 0
        %v1674 = vsel %vm482, %v1655, 0
        %v1677 = vsel %vm482, %v1656, 0
        %v1680 = vsel %vm482, %v1657, 0
        %v1683 = vsel %vm482, %v1658, 0
        %v1686 = vsel %vm482, %v1659, 0
        %v1689 = vsel %vm482, %v1660, 0
        %v1692 = vsel %vm482, %v1661, 0
        %v1695 = vsel %vm482, %v1662, 0
        %v1698 = vsel %vm482, %v1663, 0
        %v1701 = vsel %vm482, %v1664, 0
        %1703 = vmatprep.subr.mxu0 0.0
        %1704 = vmatpush1.msra.mxu0 0.0
        %1705 = vmatprep.subr.mxu0 0.0
        %1706 = vmatpush1.msra.mxu0 0.0
        %1707 = vmatprep.subr.mxu0 0.0
        %1708 = vmatpush1.msra.mxu0 0.0
        %1709 = vmatprep.subr.mxu0 0.0
        %1710 = vmatpush1.msra.mxu0 0.0
        %1711 = vmatprep.subr.mxu0 0.0
        %1712 = vmatpush1.msra.mxu0 0.0
        %1713 = vmatprep.subr.mxu0 0.0
        %1714 = vmatpush1.msra.mxu0 0.0
        %1715 = vmatprep.subr.mxu0 0.0
        %1716 = vmatpush1.msra.mxu0 0.0
        %1717 = vmatprep.subr.mxu0 0.0
        %1718 = vmatpush1.msra.mxu0 0.0
        %1719 = vmatprep.subr.mxu0 0.0
        %1720 = vmatpush1.msra.mxu0 0.0
        %1721 = vmatprep.subr.mxu0 0.0
        %1722 = vmatpush1.msra.mxu0 0.0
        %1723 = vmatprep.subr.mxu0 0.0
        %1724 = vmatpush1.msra.mxu0 0.0
        %1725 = vmatprep.subr.mxu0 0.0
        %1726 = vmatpush1.msra.mxu0 0.0
        %1727 = vmatprep.subr.mxu0 0.0
        %1728 = vmatpush1.msra.mxu0 0.0
        %1729 = vmatprep.subr.mxu0 0.0
        %1730 = vmatpush1.msra.mxu0 0.0
        %1731 = vmatprep.subr.mxu0 0.0
        %1732 = vmatpush1.msra.mxu0 %v1666
        %1733 = vmatprep.subr.mxu0 0.0
        %1734 = vmatpush1.msra.mxu0 %v1665
        %1735 = vmatprep.subr.mxu0 0.0
        %1736 = vmatpush2.msra.mxu0 0.0
        %1737 = vmatprep.subr.mxu0 0.0
        %1738 = vmatpush2.msra.mxu0 0.0
        %1739 = vmatprep.subr.mxu0 0.0
        %1740 = vmatpush2.msra.mxu0 0.0
        %1741 = vmatprep.subr.mxu0 0.0
        %1742 = vmatpush2.msra.mxu0 0.0
        %1743 = vmatprep.subr.mxu0 0.0
        %1744 = vmatpush2.msra.mxu0 0.0
        %1745 = vmatprep.subr.mxu0 0.0
        %1746 = vmatpush2.msra.mxu0 0.0
        %1747 = vmatprep.subr.mxu0 0.0
        %1748 = vmatpush2.msra.mxu0 0.0
        %1749 = vmatprep.subr.mxu0 0.0
        %1750 = vmatpush2.msra.mxu0 0.0
        %1751 = vmatprep.subr.mxu0 0.0
        %1752 = vmatpush2.msra.mxu0 0.0
        %1753 = vmatprep.subr.mxu0 0.0
        %1754 = vmatpush2.msra.mxu0 0.0
        %1755 = vmatprep.subr.mxu0 0.0
        %1756 = vmatpush2.msra.mxu0 0.0
        %1757 = vmatprep.subr.mxu0 0.0
        %1758 = vmatpush2.msra.mxu0 0.0
        %1759 = vmatprep.subr.mxu0 0.0
        %1760 = vmatpush2.msra.mxu0 0.0
        %1761 = vmatprep.subr.mxu0 0.0
        %1762 = vmatpush2.msra.mxu0 0.0
        %1763 = vmatprep.subr.mxu0 0.0
        %1764 = vmatpush2.msra.mxu0 0.0
        %1765 = vmatprep.subr.mxu0 0.0
        %1766 = vmatpush2.msra.mxu0 0.0
        %1767 = vmatprep.mubr.f32.mxu0 0.0
        %1768 = vmatmul.mubr.f32.gmra.mxu0 %v1668
        %v1769 = vpop.f32.mrf.mxu0
        %v1770 = vadd.f32 0.0, %v1769
        %v1771 = vpop.f32.mrf.mxu0
        %1772 = vmatprep.mubr.f32.mxu0 0.0
        %1773 = vmatmul.mubr.f32.gmra.mxu0 %v1671
        %v1774 = vpop.f32.mrf.mxu0
        %v1775 = vadd.f32 0.0, %v1774
        %v1776 = vpop.f32.mrf.mxu0
        %1777 = vmatprep.mubr.f32.mxu0 0.0
        %1778 = vmatmul.mubr.f32.gmra.mxu0 %v1674
        %v1779 = vpop.f32.mrf.mxu0
        %v1780 = vadd.f32 0.0, %v1779
        %v1781 = vpop.f32.mrf.mxu0
        %1782 = vmatprep.mubr.f32.mxu0 0.0
        %1783 = vmatmul.mubr.f32.gmra.mxu0 %v1677
        %v1784 = vpop.f32.mrf.mxu0
        %v1785 = vadd.f32 0.0, %v1784
        %v1786 = vpop.f32.mrf.mxu0
        %1787 = vmatprep.mubr.f32.mxu0 0.0
        %1788 = vmatmul.mubr.f32.gmra.mxu0 %v1680
        %v1789 = vpop.f32.mrf.mxu0
        %v1790 = vadd.f32 0.0, %v1789
        %v1791 = vpop.f32.mrf.mxu0
        %1792 = vmatprep.mubr.f32.mxu0 0.0
        %1793 = vmatmul.mubr.f32.gmra.mxu0 %v1683
        %v1794 = vpop.f32.mrf.mxu0
        %v1795 = vadd.f32 0.0, %v1794
        %v1796 = vpop.f32.mrf.mxu0
        %1797 = vmatprep.mubr.f32.mxu0 0.0
        %1798 = vmatmul.mubr.f32.gmra.mxu0 %v1686
        %v1799 = vpop.f32.mrf.mxu0
        %v1800 = vadd.f32 0.0, %v1799
        %v1801 = vpop.f32.mrf.mxu0
        %1802 = vmatprep.mubr.f32.mxu0 0.0
        %1803 = vmatmul.mubr.f32.gmra.mxu0 %v1689
        %v1804 = vpop.f32.mrf.mxu0
        %v1805 = vadd.f32 0.0, %v1804
        %v1806 = vpop.f32.mrf.mxu0
        %1807 = vmatprep.mubr.f32.mxu0 0.0
        %1808 = vmatmul.mubr.f32.gmra.mxu0 %v1692
        %v1809 = vpop.f32.mrf.mxu0
        %v1810 = vadd.f32 0.0, %v1809
        %v1811 = vpop.f32.mrf.mxu0
        %1812 = vmatprep.mubr.f32.mxu0 0.0
        %1813 = vmatmul.mubr.f32.gmra.mxu0 %v1695
        %v1814 = vpop.f32.mrf.mxu0
        %v1815 = vadd.f32 0.0, %v1814
        %v1816 = vpop.f32.mrf.mxu0
        %1817 = vmatprep.mubr.f32.mxu0 0.0
        %1818 = vmatmul.mubr.f32.gmra.mxu0 %v1698
        %v1819 = vpop.f32.mrf.mxu0
        %v1820 = vadd.f32 0.0, %v1819
        %v1821 = vpop.f32.mrf.mxu0
        %1822 = vmatprep.mubr.f32.mxu0 0.0
        %1823 = vmatmul.mubr.f32.gmra.mxu0 %v1701
        %v1824 = vpop.f32.mrf.mxu0
        %v1825 = vadd.f32 0.0, %v1824
        %v1826 = vpop.f32.mrf.mxu0
        %1827 = vdwg.mxu0
        %vm1828 = vcmask 80896
        %1829 = vst.msk [vmem:[%s466] sm:$0xff] %vm1828, %v1595
        %vm1830 = vcmask 74752
        %1831 = vst.msk [vmem:[%s466 + $0x8] sm:$0x3] %vm1830, %v1600
        %1832 = vst.msk [vmem:[%s473] sm:$0xff] %vm482, %v1770
        %1833 = vst.msk [vmem:[%s473 + $0x8] sm:$0xff] %vm482, %v1775
        %s1834 = scalar_lea.vmem %s466, 16 [#allocation14]
        %1835 = vst.msk [vmem:[%s1834] sm:$0xff] %vm1828, %v1605
        %1836 = vst.msk [vmem:[%s1834 + $0x8] sm:$0x3] %vm1830, %v1610
        %s1837 = scalar_lea.vmem %s473, 16 [#allocation15]
        %1838 = vst.msk [vmem:[%s1837] sm:$0xff] %vm482, %v1780
        %1839 = vst.msk [vmem:[%s1837 + $0x8] sm:$0xff] %vm482, %v1785
        %s1840 = scalar_lea.vmem %s466, 32 [#allocation14]
        %1841 = vst.msk [vmem:[%s1840] sm:$0xff] %vm1828, %v1615
        %1842 = vst.msk [vmem:[%s1840 + $0x8] sm:$0x3] %vm1830, %v1620
        %s1843 = scalar_lea.vmem %s473, 32 [#allocation15]
        %1844 = vst.msk [vmem:[%s1843] sm:$0xff] %vm482, %v1790
        %1845 = vst.msk [vmem:[%s1843 + $0x8] sm:$0xff] %vm482, %v1795
        %s1846 = scalar_lea.vmem %s466, 48 [#allocation14]
        %1847 = vst.msk [vmem:[%s1846] sm:$0xff] %vm1828, %v1625
        %1848 = vst.msk [vmem:[%s1846 + $0x8] sm:$0x3] %vm1830, %v1630
        %s1849 = scalar_lea.vmem %s473, 48 [#allocation15]
        %1850 = vst.msk [vmem:[%s1849] sm:$0xff] %vm482, %v1800
        %1851 = vst.msk [vmem:[%s1849 + $0x8] sm:$0xff] %vm482, %v1805
        %s1852 = scalar_lea.vmem %s466, 64 [#allocation14]
        %1853 = vst.msk [vmem:[%s1852] sm:$0xff] %vm1828, %v1635
        %1854 = vst.msk [vmem:[%s1852 + $0x8] sm:$0x3] %vm1830, %v1640
        %s1855 = scalar_lea.vmem %s473, 64 [#allocation15]
        %1856 = vst.msk [vmem:[%s1855] sm:$0xff] %vm482, %v1810
        %1857 = vst.msk [vmem:[%s1855 + $0x8] sm:$0xff] %vm482, %v1815
        %s1858 = scalar_lea.vmem %s466, 80 [#allocation14]
        %1859 = vst.msk [vmem:[%s1858] sm:$0xff] %vm1828, %v1645
        %1860 = vst.msk [vmem:[%s1858 + $0x8] sm:$0x3] %vm1830, %v1650
        %s1861 = scalar_lea.vmem %s473, 80 [#allocation15]
        %1862 = vst.msk [vmem:[%s1861] sm:$0xff] %vm482, %v1820
        %1863 = vst.msk [vmem:[%s1861 + $0x8] sm:$0xff] %vm482, %v1825
        %s1864 = sand.u32 %s187, 1
        %s1865 = sand.u32 %s187, 1
        %s1866 = smul.addr %s1865, 96
        %s1867 = scalar_lea.vmem [#allocation14], %s1866
        %s1868 = sand.u32 %s215, 1
        %s1869 = scalar_lea.sflag [#allocation6], %s1868
        %s1870 = sand.u32 %s215, 1
        %s1871 = smul.addr %s1870, 96
        %s1872 = scalar_lea.vmem [#allocation15], %s1871
        // Predicated region
        $region69: #{net_forward.1} parent=43 // pred_check
          %p1873 = pneg %p197
        $region70: #{net_forward.1} parent=43 // pred_check_branch
          %1875 = sbr.rel (%p1873) target = $region72
        $region71: #{net_forward.1} parent=43 // pred_region
          %s1876 = smul.u32 2, %s30
          %s1877 = smul.addr %s1876, 2
          %s1878 = smul.addr %s29, 48
          %s1879 = sadd.s32 %s1877, %s1878
          %s1880 = smul.addr %s1879, 8
          %s1881 = scalar_lea.vmem %s6, %s1880
          // Predicated region
          $region73: #{net_forward.1} parent=71 // pred_check
            _
          $region74: #{net_forward.1} parent=71 // pred_check_branch
            %1883 = sbr.rel (0) target = $region76
          $region75: #{net_forward.1} parent=71 // pred_region
            // Predicated region
            $region77: #{net_forward.1} parent=75 // pred_check
              _
            $region78: #{net_forward.1} parent=75 // pred_check_branch
              %1885 = sbr.rel (0) target = $region80
            $region79: #{net_forward.1} parent=75 // pred_region
              // Predicated region
              $region92: #{net_forward.1} parent=79 // pred_check
                _
              $region93: #{net_forward.1} parent=79 // pred_check_branch
                %1923 = sbr.rel (0) target = $region95
              $region94: #{net_forward.1} parent=79 // pred_region
                loop: start=0, step=1, limit=1
                $region96: #{net_forward.1} parent=94 // loop_pre_header
                  _
                $region97: #{net_forward.1} parent=94 // loop_header
                  %s1925 = sphi 0, %s1929
                  %p1926 = scmp.ge.s32.totalorder %s1925, 1
                  %s1930 = sphi %s1867, %s1867
                  %s1931 = sphi %s1881, %s1881
                $region98: #{net_forward.1} parent=94 // loop_header_branch
                  %1928 = sbr.rel (%p1926) target = $region102
                $region99: #{net_forward.1} parent=94 // loop_body
                  %v1932 = vld [vmem:[%s1930] sm:$0xff]
                  %1933 = vst [vmem:[%s1931] sm:$0xff] %v1932
                  %v1934 = vld [vmem:[%s1930 + $0x8] sm:$0xff]
                  %1935 = vst [vmem:[%s1931 + $0x8] sm:$0xff] %v1934
                  %v1936 = vld [vmem:[%s1930 + $0x10] sm:$0xff]
                  %1937 = vst [vmem:[%s1931 + $0x10] sm:$0xff] %v1936
                  %v1938 = vld [vmem:[%s1930 + $0x18] sm:$0xff]
                  %1939 = vst [vmem:[%s1931 + $0x18] sm:$0xff] %v1938
                  %v1940 = vld [vmem:[%s1930 + $0x20] sm:$0xff]
                  %1941 = vst [vmem:[%s1931 + $0x80] sm:$0xff] %v1940
                  %v1942 = vld [vmem:[%s1930 + $0x28] sm:$0xff]
                  %1943 = vst [vmem:[%s1931 + $0x88] sm:$0xff] %v1942
                  %v1944 = vld [vmem:[%s1930 + $0x30] sm:$0xff]
                  %1945 = vst [vmem:[%s1931 + $0x90] sm:$0xff] %v1944
                  %v1946 = vld [vmem:[%s1930 + $0x38] sm:$0xff]
                  %1947 = vst [vmem:[%s1931 + $0x98] sm:$0xff] %v1946
                  %v1948 = vld [vmem:[%s1930 + $0x40] sm:$0xff]
                  %1949 = vst [vmem:[%s1931 + $0x100] sm:$0xff] %v1948
                  %v1950 = vld [vmem:[%s1930 + $0x48] sm:$0xff]
                  %1951 = vst [vmem:[%s1931 + $0x108] sm:$0xff] %v1950
                  %v1952 = vld [vmem:[%s1930 + $0x50] sm:$0xff]
                  %1953 = vst [vmem:[%s1931 + $0x110] sm:$0xff] %v1952
                  %v1954 = vld [vmem:[%s1930 + $0x58] sm:$0xff]
                  %1955 = vst [vmem:[%s1931 + $0x118] sm:$0xff] %v1954
                $region100: #{net_forward.1} parent=94 // loop_footer
                  %s1929 = sadd.s32 1, %s1925
                $region101: #{net_forward.1} parent=94 // loop_footer_branch
                  %1924 = sbr.rel target = $region97
                $region102: #{net_forward.1} parent=94 // loop_exit
                  _
              $region95: #{net_forward.1} parent=79 // pred_fallthru
                _
              // Predicated region
              $region103: #{net_forward.1} parent=79 // pred_check
                _
              $region104: #{net_forward.1} parent=79 // pred_check_branch
                %1957 = sbr.rel target = $region106
              $region105: #{net_forward.1} parent=79 // pred_region
                _
              $region106: #{net_forward.1} parent=79 // pred_fallthru
                _
            $region80: #{net_forward.1} parent=75 // pred_fallthru
              _
            // Predicated region
            $region81: #{net_forward.1} parent=75 // pred_check
              _
            $region82: #{net_forward.1} parent=75 // pred_check_branch
              %1887 = sbr.rel target = $region84
            $region83: #{net_forward.1} parent=75 // pred_region
              %s1889 = ssub.s32 256, 1
              loop: start=0, step=1, limit=1
              $region85: #{net_forward.1} parent=83 // loop_pre_header
                _
              $region86: #{net_forward.1} parent=83 // loop_header
                %s1891 = sphi 0, %s1895
                %p1892 = scmp.ge.s32.totalorder %s1891, 1
                %s1896 = sphi %s1867, %s1867
                %s1897 = sphi %s1881, %s1881
              $region87: #{net_forward.1} parent=83 // loop_header_branch
                %1894 = sbr.rel (%p1892) target = $region91
              $region88: #{net_forward.1} parent=83 // loop_body
                %v1898 = vld [vmem:[%s1896] sm:%s1889]
                %1899 = vst [vmem:[%s1897] sm:%s1889] %v1898
                %v1900 = vld [vmem:[%s1896 + $0x8] sm:%s1889]
                %1901 = vst [vmem:[%s1897 + $0x8] sm:%s1889] %v1900
                %v1902 = vld [vmem:[%s1896 + $0x10] sm:%s1889]
                %1903 = vst [vmem:[%s1897 + $0x10] sm:%s1889] %v1902
                %v1904 = vld [vmem:[%s1896 + $0x18] sm:%s1889]
                %1905 = vst [vmem:[%s1897 + $0x18] sm:%s1889] %v1904
                %v1906 = vld [vmem:[%s1896 + $0x20] sm:%s1889]
                %1907 = vst [vmem:[%s1897 + $0x80] sm:%s1889] %v1906
                %v1908 = vld [vmem:[%s1896 + $0x28] sm:%s1889]
                %1909 = vst [vmem:[%s1897 + $0x88] sm:%s1889] %v1908
                %v1910 = vld [vmem:[%s1896 + $0x30] sm:%s1889]
                %1911 = vst [vmem:[%s1897 + $0x90] sm:%s1889] %v1910
                %v1912 = vld [vmem:[%s1896 + $0x38] sm:%s1889]
                %1913 = vst [vmem:[%s1897 + $0x98] sm:%s1889] %v1912
                %v1914 = vld [vmem:[%s1896 + $0x40] sm:%s1889]
                %1915 = vst [vmem:[%s1897 + $0x100] sm:%s1889] %v1914
                %v1916 = vld [vmem:[%s1896 + $0x48] sm:%s1889]
                %1917 = vst [vmem:[%s1897 + $0x108] sm:%s1889] %v1916
                %v1918 = vld [vmem:[%s1896 + $0x50] sm:%s1889]
                %1919 = vst [vmem:[%s1897 + $0x110] sm:%s1889] %v1918
                %v1920 = vld [vmem:[%s1896 + $0x58] sm:%s1889]
                %1921 = vst [vmem:[%s1897 + $0x118] sm:%s1889] %v1920
              $region89: #{net_forward.1} parent=83 // loop_footer
                %s1895 = sadd.s32 1, %s1891
              $region90: #{net_forward.1} parent=83 // loop_footer_branch
                %1890 = sbr.rel target = $region86
              $region91: #{net_forward.1} parent=83 // loop_exit
                _
            $region84: #{net_forward.1} parent=75 // pred_fallthru
              _
          $region76: #{net_forward.1} parent=71 // pred_fallthru
            _
          %1958 = vnop
        $region72: #{net_forward.1} parent=43 // pred_fallthru
          _
        // Predicated region
        $region107: #{net_forward.1} parent=43 // pred_check
          %p1959 = pneg %p225
        $region108: #{net_forward.1} parent=43 // pred_check_branch
          %1961 = sbr.rel (%p1959) target = $region110
        $region109: #{net_forward.1} parent=43 // pred_region
          #allocation21 [shape = 'u32[6]{0}', space=smem, size = 0x18, scoped, tag = 'DMA stride descriptor']
          %s1962 = smul.u32 2, %s30
          %s1964 = ssub.s32 1536, 1536
          %1965 = vsyncadd %s1869, %s1964
          %s1966 = smul.addr %s1962, 2
          %s1967 = smul.addr %s29, 48
          %s1968 = sadd.s32 %s1966, %s1967
          %s1969 = smul.addr %s1968, 128
          %s1970 = scalar_lea.hbm %s7, %s1969
          %s1972 = sshll.u32 1, 14
          %s1973 = sxor.u32 4294967295, %s1972
          %s1976 = sshll.u32 7, 18
          %s1977 = sxor.u32 4294967295, %s1976
          %s1978 = sand.u32 0, %s1977
          %s1980 = sor.u32 %s1978, 0
          %s1981 = sshll.u32 %s1872, 4
          %s1982 = int_to_ptr.vmem [resolvable:$true] %s1981
          %1988 = sst [smem:[#allocation21]] 512
          %s1989 = scalar_lea.smem [#allocation21], 1
          %1990 = sst [smem:[%s1989]] 2048
          %s1991 = scalar_lea.smem [#allocation21], 2
          %1992 = sst [smem:[%s1991]] 4
          %s1993 = scalar_lea.smem [#allocation21], 3
          %1994 = sst [smem:[%s1993]] 128
          %s1995 = scalar_lea.smem [#allocation21], 4
          %1996 = sst [smem:[%s1995]] 128
          %s1997 = scalar_lea.smem [#allocation21], 5
          %1998 = sst [smem:[%s1997]] 8
          %2000 = dma.general %s1982, 1536, %s1970, %s1869, 131072, [#allocation21], %s1980, 0
        $region110: #{net_forward.1} parent=43 // pred_fallthru
          _
      $region44: #{net_forward.1} parent=5 // pred_fallthru
        _
      %p2001 = scmp.le.s32.totalorder 2, %s20
      // Predicated region
      $region111: #{net_forward.1} parent=5 // pred_check
        %p2002 = pneg %p2001
      $region112: #{net_forward.1} parent=5 // pred_check_branch
        %2004 = sbr.rel (%p2002) target = $region114
      $region113: #{net_forward.1} parent=5 // pred_region
        %s2005 = ssub.s32 %s20, 2
        // Predicated region
        $region115: #{net_forward.1} parent=113 // pred_check
          %p2006 = pneg %p203
        $region116: #{net_forward.1} parent=113 // pred_check_branch
          %2008 = sbr.rel (%p2006) target = $region118
        $region117: #{net_forward.1} parent=113 // pred_region
          %s2009 = sand.u32 %s188, 1
          %s2010 = sand.u32 %s188, 1
          %s2011 = smul.addr %s2010, 96
          %s2012 = scalar_lea.vmem [#allocation14], %s2011
        $region118: #{net_forward.1} parent=113 // pred_fallthru
          _
        // Predicated region
        $region119: #{net_forward.1} parent=113 // pred_check
          %p2013 = pneg %p231
        $region120: #{net_forward.1} parent=113 // pred_check_branch
          %2015 = sbr.rel (%p2013) target = $region122
        $region121: #{net_forward.1} parent=113 // pred_region
          %s2016 = sand.u32 %s216, 1
          %s2017 = scalar_lea.sflag [#allocation6], %s2016
          %s2018 = sand.u32 %s216, 1
          %s2019 = smul.addr %s2018, 96
          %s2020 = scalar_lea.vmem [#allocation15], %s2019
          %2021 = dma.done %s2017, 1536
        $region122: #{net_forward.1} parent=113 // pred_fallthru
          _
      $region114: #{net_forward.1} parent=5 // pred_fallthru
        _
    $region6: #{net_forward.1} parent=1 // loop_footer
      %s24 = sadd.s32 1, %s20
    $region7: #{net_forward.1} parent=1 // loop_footer_branch
      %19 = sbr.rel target = $region3
    $region8: #{net_forward.1} parent=1 // loop_exit
      _
    %2022 = vsyncpa [#allocation5], 1
    %s2023 = scalar_lea.sflag [#allocation5], 1
    %2024 = vsyncpa %s2023, 1
    %2025 = vsyncpa [#allocation8], 1
    %2026 = vsyncpa [#allocation11], 1
    %2027 = vsyncpa [#allocation6], 1
    %s2028 = scalar_lea.sflag [#allocation6], 1
    %2029 = vsyncpa %s2028, 1

</llo_original>
